<compile_context>
chip_gen: v6e
topology: v6e:2x2x1
jax: 0.10.0
libtpu: 0.0.40
codegen_flags: <defaults>
</compile_context>

<pallas_src>
import jax
import jax.numpy as jnp
from jax.experimental import pallas as pl
from jax.experimental.pallas import tpu as pltpu

LAMBD = 0.5
OUT_PAD = 128          # lane-dense padded output width (true output is 10)
DEFAULT_TM = 256       # batch tile; comfortably within VMEM on v5e/v6e/v7x


def _softshrink(x, lambd=LAMBD):
    # softshrink(x) == x - clip(x, -lambd, lambd)   (min, max, sub on the VPU)
    return x - jnp.clip(x, -lambd, lambd)


def _round_up(a, m):
    return ((a + m - 1) // m) * m


def mlp_softshrink_kernel(x_ref,
                          w1_ref, b1_ref,
                          w2_ref, b2_ref,
                          w3_ref, b3_ref,
                          w4_ref, b4_ref,
                          o_ref):
    def layer(h_bf16, w_ref, b_ref):
        # bf16 x bf16 -> f32 accumulate on the MXU; bias add in f32 on the VPU.
        acc = jnp.dot(h_bf16, w_ref[...], preferred_element_type=jnp.float32)
        return acc + b_ref[...]

    h = layer(x_ref[...], w1_ref, b1_ref)                 # f32 [TM, 256]
    h = _softshrink(h).astype(jnp.bfloat16)
    h = layer(h, w2_ref, b2_ref)
    h = _softshrink(h).astype(jnp.bfloat16)
    h = layer(h, w3_ref, b3_ref)
    h = _softshrink(h).astype(jnp.bfloat16)
    o_ref[...] = layer(h, w4_ref, b4_ref)                 # f32, lane-dense 128


def mlp_softshrink(x, params, *, tm=DEFAULT_TM):
    """x: [B, input_size] f32. params: list of (W [in,out] f32, b [1,out] f32)."""
    (w1, b1), (w2, b2), (w3, b3), (w4, b4) = params
    B, K = x.shape
    out_size = w4.shape[1]

    # ---- pad the first-layer contraction dim to a lane-dense multiple of 128 ----
    Kp = _round_up(K, 128)
    if Kp != K:
        x = jnp.pad(x, ((0, 0), (0, Kp - K)))
        w1 = jnp.pad(w1, ((0, Kp - K), (0, 0)))           # zero rows: exact math

    # ---- batch tiling: TM rows per grid step (16-row granularity for bf16) ----
    TM = max(16, min(tm, _round_up(B, 16)))
    Bp = _round_up(B, TM)
    if Bp != B:
        x = jnp.pad(x, ((0, Bp - B), (0, 0)))
    grid = (Bp // TM,)

    # ---- last layer lane-padded to 128; all matmul operands cast to bf16 ----
    w4p = jnp.pad(w4, ((0, 0), (0, OUT_PAD - out_size)))
    b4p = jnp.pad(b4, ((0, 0), (0, OUT_PAD - out_size)))
    xb = x.astype(jnp.bfloat16)
    w1b = w1.astype(jnp.bfloat16)
    w2b = w2.astype(jnp.bfloat16)
    w3b = w3.astype(jnp.bfloat16)
    w4b = w4p.astype(jnp.bfloat16)

    def tile_spec(shape):   # batch-tiled activation / output
        return pl.BlockSpec(shape, lambda i: (i, 0))

    def const_spec(shape):  # weights / biases: same block every step (VMEM-resident)
        return pl.BlockSpec(shape, lambda i: (0, 0))

    in_arrays = (xb, w1b, b1, w2b, b2, w3b, b3, w4b, b4p)
    in_specs = [tile_spec((TM, Kp))] + [const_spec(a.shape) for a in in_arrays[1:]]

    h1, h2, h3 = w1.shape[1], w2.shape[1], w3.shape[1]
    flops = 2 * Bp * (Kp * h1 + h1 * h2 + h2 * h3 + h3 * OUT_PAD)
    bytes_accessed = (xb.size * 2
                      + sum(int(w.size) * 2 for w in (w1b, w2b, w3b, w4b))
                      + sum(int(b.size) * 4 for b in (b1, b2, b3, b4p))
                      + Bp * OUT_PAD * 4)

    out = pl.pallas_call(
        mlp_softshrink_kernel,
        out_shape=jax.ShapeDtypeStruct((Bp, OUT_PAD), jnp.float32),
        grid_spec=pltpu.PrefetchScalarGridSpec(
            num_scalar_prefetch=0,
            grid=grid,
            in_specs=in_specs,
            out_specs=tile_spec((TM, OUT_PAD)),
        ),
        compiler_params=pltpu.CompilerParams(
            dimension_semantics=("parallel",)),
        cost_estimate=pl.CostEstimate(
            flops=flops, transcendentals=0, bytes_accessed=bytes_accessed),
    )(*in_arrays)

    return out[:B, :out_size]


def init_params(key, input_size=784, lin1=256, lin2=256, lin3=256, out=10):
    dims = [(input_size, lin1), (lin1, lin2), (lin2, lin3), (lin3, out)]
    params = []
    for fan_in, fan_out in dims:
        kw, kb, key = jax.random.split(key, 3)
        bound = 1.0 / (fan_in ** 0.5)  # matches PyTorch Linear default init range
        w = jax.random.uniform(kw, (fan_in, fan_out), jnp.float32, -bound, bound)
        b = jax.random.uniform(kb, (1, fan_out), jnp.float32, -bound, bound)
        params.append((w, b))
    return params


def reference_forward(x, params):
    h = x
    for i, (w, b) in enumerate(params):
        h = h @ w + b
        if i < len(params) - 1:
            h = _softshrink(h)
    return h


if __name__ == "__main__":
    key = jax.random.PRNGKey(0)
    kx, kp = jax.random.split(key)

    batch = 8
    input_size = 784
    x = jax.random.normal(kx, (batch, input_size), jnp.float32)
    params = init_params(kp, input_size=input_size)

    out = mlp_softshrink(x, params)
    out = jax.block_until_ready(out)

    ref = reference_forward(x, params)
    assert out.shape == (batch, 10), out.shape
    # bf16 matmul operands (f32 accumulation) -> relaxed tolerance vs f32 ref.
    assert jnp.allclose(out, ref, atol=2e-2, rtol=2e-2), "mismatch vs reference"

    print("KERNEL_OK")
</pallas_src>

<mosaic_0001>
module attributes {stable_mosaic.version = 11 : i64} {
  func.func @mlp_softshrink_kernel(%arg0: i32, %arg1: memref<16x896xbf16, #tpu.memory_space<vmem>>, %arg2: memref<896x256xbf16, #tpu.memory_space<vmem>>, %arg3: memref<1x256xf32, #tpu.memory_space<vmem>>, %arg4: memref<256x256xbf16, #tpu.memory_space<vmem>>, %arg5: memref<1x256xf32, #tpu.memory_space<vmem>>, %arg6: memref<256x256xbf16, #tpu.memory_space<vmem>>, %arg7: memref<1x256xf32, #tpu.memory_space<vmem>>, %arg8: memref<256x128xbf16, #tpu.memory_space<vmem>>, %arg9: memref<1x128xf32, #tpu.memory_space<vmem>>, %arg10: memref<16x128xf32, #tpu.memory_space<vmem>>) attributes {dimension_semantics = [#tpu.dimension_semantics<parallel>], iteration_bounds = array<i64: 1>, scalar_prefetch = 0 : i64, scratch_operands = 0 : i64, tpu.core_type = #tpu.core_type<tc>, window_params = [{transform_indices = @transform_0, window_bounds = array<i64: 16, 896>}, {pipeline_mode = #tpu.pipeline_mode<synchronous>, transform_indices = @transform_1, window_bounds = array<i64: 896, 256>}, {pipeline_mode = #tpu.pipeline_mode<synchronous>, transform_indices = @transform_2, window_bounds = array<i64: 1, 256>}, {pipeline_mode = #tpu.pipeline_mode<synchronous>, transform_indices = @transform_3, window_bounds = array<i64: 256, 256>}, {pipeline_mode = #tpu.pipeline_mode<synchronous>, transform_indices = @transform_4, window_bounds = array<i64: 1, 256>}, {pipeline_mode = #tpu.pipeline_mode<synchronous>, transform_indices = @transform_5, window_bounds = array<i64: 256, 256>}, {pipeline_mode = #tpu.pipeline_mode<synchronous>, transform_indices = @transform_6, window_bounds = array<i64: 1, 256>}, {pipeline_mode = #tpu.pipeline_mode<synchronous>, transform_indices = @transform_7, window_bounds = array<i64: 256, 128>}, {pipeline_mode = #tpu.pipeline_mode<synchronous>, transform_indices = @transform_8, window_bounds = array<i64: 1, 128>}, {transform_indices = @transform_9, window_bounds = array<i64: 16, 128>}]} {
    %c0 = arith.constant 0 : index
    %c0_0 = arith.constant 0 : index
    %0 = vector.load %arg1[%c0, %c0_0] : memref<16x896xbf16, #tpu.memory_space<vmem>>, vector<16x896xbf16>
    %c0_1 = arith.constant 0 : index
    %c0_2 = arith.constant 0 : index
    %1 = vector.load %arg2[%c0_1, %c0_2] : memref<896x256xbf16, #tpu.memory_space<vmem>>, vector<896x256xbf16>
    %cst = arith.constant dense<0.000000e+00> : vector<16x256xf32>
    %2 = tpu.matmul %0, %1, %cst {dimension_numbers = #tpu.dot_dimension_numbers<[1], [0], [0], [1], [0, 0, 1, 1], [], []>} : vector<16x896xbf16>, vector<896x256xbf16>, vector<16x256xf32> -> vector<16x256xf32>
    %c0_3 = arith.constant 0 : index
    %c0_4 = arith.constant 0 : index
    %3 = vector.load %arg3[%c0_3, %c0_4] : memref<1x256xf32, #tpu.memory_space<vmem>>, vector<1x256xf32>
    %4 = vector.broadcast %3 : vector<1x256xf32> to vector<16x256xf32>
    %5 = arith.addf %2, %4 : vector<16x256xf32>
    %cst_5 = arith.constant -5.000000e-01 : f32
    %cst_6 = arith.constant 5.000000e-01 : f32
    %6 = vector.broadcast %cst_5 : f32 to vector<16x256xf32>
    %7 = arith.maximumf %6, %5 : vector<16x256xf32>
    %8 = vector.broadcast %cst_6 : f32 to vector<16x256xf32>
    %9 = arith.minimumf %8, %7 : vector<16x256xf32>
    %10 = arith.subf %5, %9 : vector<16x256xf32>
    %11 = arith.truncf %10 : vector<16x256xf32> to vector<16x256xbf16>
    %c0_7 = arith.constant 0 : index
    %c0_8 = arith.constant 0 : index
    %12 = vector.load %arg4[%c0_7, %c0_8] : memref<256x256xbf16, #tpu.memory_space<vmem>>, vector<256x256xbf16>
    %cst_9 = arith.constant dense<0.000000e+00> : vector<16x256xf32>
    %13 = tpu.matmul %11, %12, %cst_9 {dimension_numbers = #tpu.dot_dimension_numbers<[1], [0], [0], [1], [0, 0, 1, 1], [], []>} : vector<16x256xbf16>, vector<256x256xbf16>, vector<16x256xf32> -> vector<16x256xf32>
    %c0_10 = arith.constant 0 : index
    %c0_11 = arith.constant 0 : index
    %14 = vector.load %arg5[%c0_10, %c0_11] : memref<1x256xf32, #tpu.memory_space<vmem>>, vector<1x256xf32>
    %15 = vector.broadcast %14 : vector<1x256xf32> to vector<16x256xf32>
    %16 = arith.addf %13, %15 : vector<16x256xf32>
    %cst_12 = arith.constant -5.000000e-01 : f32
    %cst_13 = arith.constant 5.000000e-01 : f32
    %17 = vector.broadcast %cst_12 : f32 to vector<16x256xf32>
    %18 = arith.maximumf %17, %16 : vector<16x256xf32>
    %19 = vector.broadcast %cst_13 : f32 to vector<16x256xf32>
    %20 = arith.minimumf %19, %18 : vector<16x256xf32>
    %21 = arith.subf %16, %20 : vector<16x256xf32>
    %22 = arith.truncf %21 : vector<16x256xf32> to vector<16x256xbf16>
    %c0_14 = arith.constant 0 : index
    %c0_15 = arith.constant 0 : index
    %23 = vector.load %arg6[%c0_14, %c0_15] : memref<256x256xbf16, #tpu.memory_space<vmem>>, vector<256x256xbf16>
    %cst_16 = arith.constant dense<0.000000e+00> : vector<16x256xf32>
    %24 = tpu.matmul %22, %23, %cst_16 {dimension_numbers = #tpu.dot_dimension_numbers<[1], [0], [0], [1], [0, 0, 1, 1], [], []>} : vector<16x256xbf16>, vector<256x256xbf16>, vector<16x256xf32> -> vector<16x256xf32>
    %c0_17 = arith.constant 0 : index
    %c0_18 = arith.constant 0 : index
    %25 = vector.load %arg7[%c0_17, %c0_18] : memref<1x256xf32, #tpu.memory_space<vmem>>, vector<1x256xf32>
    %26 = vector.broadcast %25 : vector<1x256xf32> to vector<16x256xf32>
    %27 = arith.addf %24, %26 : vector<16x256xf32>
    %cst_19 = arith.constant -5.000000e-01 : f32
    %cst_20 = arith.constant 5.000000e-01 : f32
    %28 = vector.broadcast %cst_19 : f32 to vector<16x256xf32>
    %29 = arith.maximumf %28, %27 : vector<16x256xf32>
    %30 = vector.broadcast %cst_20 : f32 to vector<16x256xf32>
    %31 = arith.minimumf %30, %29 : vector<16x256xf32>
    %32 = arith.subf %27, %31 : vector<16x256xf32>
    %33 = arith.truncf %32 : vector<16x256xf32> to vector<16x256xbf16>
    %c0_21 = arith.constant 0 : index
    %c0_22 = arith.constant 0 : index
    %34 = vector.load %arg8[%c0_21, %c0_22] : memref<256x128xbf16, #tpu.memory_space<vmem>>, vector<256x128xbf16>
    %cst_23 = arith.constant dense<0.000000e+00> : vector<16x128xf32>
    %35 = tpu.matmul %33, %34, %cst_23 {dimension_numbers = #tpu.dot_dimension_numbers<[1], [0], [0], [1], [0, 0, 1, 1], [], []>} : vector<16x256xbf16>, vector<256x128xbf16>, vector<16x128xf32> -> vector<16x128xf32>
    %c0_24 = arith.constant 0 : index
    %c0_25 = arith.constant 0 : index
    %36 = vector.load %arg9[%c0_24, %c0_25] : memref<1x128xf32, #tpu.memory_space<vmem>>, vector<1x128xf32>
    %37 = vector.broadcast %36 : vector<1x128xf32> to vector<16x128xf32>
    %38 = arith.addf %35, %37 : vector<16x128xf32>
    %c0_26 = arith.constant 0 : index
    %c0_27 = arith.constant 0 : index
    %39 = vector.load %arg10[%c0_26, %c0_27] : memref<16x128xf32, #tpu.memory_space<vmem>>, vector<16x128xf32>
    tpu.vector_store %arg10[%c0_26, %c0_27], %38 {strides = array<i32>} : memref<16x128xf32, #tpu.memory_space<vmem>>, vector<16x128xf32>,
    return
  }
  func.func @transform_0(%arg0: i32) -> (i32, i32) {
    %c0_i32 = arith.constant 0 : i32
    %c0_i32_0 = arith.constant 0 : i32
    return %arg0, %c0_i32 : i32, i32
  }
  func.func @transform_1(%arg0: i32) -> (i32, i32) {
    %c0_i32 = arith.constant 0 : i32
    %c0_i32_0 = arith.constant 0 : i32
    %c0_i32_1 = arith.constant 0 : i32
    return %c0_i32, %c0_i32_0 : i32, i32
  }
  func.func @transform_2(%arg0: i32) -> (i32, i32) {
    %c0_i32 = arith.constant 0 : i32
    %c0_i32_0 = arith.constant 0 : i32
    %c0_i32_1 = arith.constant 0 : i32
    return %c0_i32, %c0_i32_0 : i32, i32
  }
  func.func @transform_3(%arg0: i32) -> (i32, i32) {
    %c0_i32 = arith.constant 0 : i32
    %c0_i32_0 = arith.constant 0 : i32
    %c0_i32_1 = arith.constant 0 : i32
    return %c0_i32, %c0_i32_0 : i32, i32
  }
  func.func @transform_4(%arg0: i32) -> (i32, i32) {
    %c0_i32 = arith.constant 0 : i32
    %c0_i32_0 = arith.constant 0 : i32
    %c0_i32_1 = arith.constant 0 : i32
    return %c0_i32, %c0_i32_0 : i32, i32
  }
  func.func @transform_5(%arg0: i32) -> (i32, i32) {
    %c0_i32 = arith.constant 0 : i32
    %c0_i32_0 = arith.constant 0 : i32
    %c0_i32_1 = arith.constant 0 : i32
    return %c0_i32, %c0_i32_0 : i32, i32
  }
  func.func @transform_6(%arg0: i32) -> (i32, i32) {
    %c0_i32 = arith.constant 0 : i32
    %c0_i32_0 = arith.constant 0 : i32
    %c0_i32_1 = arith.constant 0 : i32
    return %c0_i32, %c0_i32_0 : i32, i32
  }
  func.func @transform_7(%arg0: i32) -> (i32, i32) {
    %c0_i32 = arith.constant 0 : i32
    %c0_i32_0 = arith.constant 0 : i32
    %c0_i32_1 = arith.constant 0 : i32
    return %c0_i32, %c0_i32_0 : i32, i32
  }
  func.func @transform_8(%arg0: i32) -> (i32, i32) {
    %c0_i32 = arith.constant 0 : i32
    %c0_i32_0 = arith.constant 0 : i32
    %c0_i32_1 = arith.constant 0 : i32
    return %c0_i32, %c0_i32_0 : i32, i32
  }
  func.func @transform_9(%arg0: i32) -> (i32, i32) {
    %c0_i32 = arith.constant 0 : i32
    %c0_i32_0 = arith.constant 0 : i32
    return %arg0, %c0_i32 : i32, i32
  }
}

</mosaic_0001>

<llo_original>
// kernel: tpu_custom_call.1
$region0: #{tpu_custom_call.1}
  #allocation0 [shape = 'u32[]', space=smem, size = 0x4, offset = 0x4, fixed_abs, tag = 'smem constant byte address 0x4 - core index']
  #allocation1 [shape = 'u32[144,128]{1,0:T(1,128)}', space=vmem, size = 0x12000, scoped, tag = 'internal scratch']
  %s0 = inlined_call_operand.hbm [shape: bf16[16,896], index: 0, kind: input, shape index: {}]
  %s1 = inlined_call_operand.hbm [shape: bf16[896,256], index: 1, kind: input, shape index: {}]
  %s2 = inlined_call_operand.vmem [shape: f32[1,256], index: 2, kind: input, shape index: {}]
  %s3 = inlined_call_operand.hbm [shape: bf16[256,256], index: 3, kind: input, shape index: {}]
  %s4 = inlined_call_operand.vmem [shape: f32[1,256], index: 4, kind: input, shape index: {}]
  %s5 = inlined_call_operand.hbm [shape: bf16[256,256], index: 5, kind: input, shape index: {}]
  %s6 = inlined_call_operand.vmem [shape: f32[1,256], index: 6, kind: input, shape index: {}]
  %s7 = inlined_call_operand.hbm [shape: bf16[256,128], index: 7, kind: input, shape index: {}]
  %s8 = inlined_call_operand.vmem [shape: f32[1,128], index: 8, kind: input, shape index: {}]
  %s9 = inlined_call_operand.hbm [shape: f32[16,128], index: 9, kind: output, shape index: {}]
  %s10 = sld [smem:[#allocation0]]
  $region66: #{tpu_custom_call.1} parent=0
    _
  %s12 = ssub.s32 1, %s10
  %s13 = scalar_select 0, %s12, %s10
  $region1: #{tpu_custom_call.1} parent=0
    #allocation2 [shape = 'u8[28672]{0}', space=vmem, size = 0x7000, scoped, tag = 'input window, operand 0, single buffered']
    #allocation3 [shape = 's32[1]{0}', space=sflag, size = 0x4, scoped, tag = 'scoped memory for tpu_custom_call.1']
    #allocation4 [shape = 's32[1]{0}', space=sflag, size = 0x4, scoped, tag = 'scoped memory for tpu_custom_call.1']
    #allocation5 [shape = 'u8[458752]{0}', space=vmem, size = 0x70000, scoped, tag = 'input window, operand 1, single buffered']
    #allocation6 [shape = 's32[1]{0}', space=sflag, size = 0x4, scoped, tag = 'scoped memory for tpu_custom_call.1']
    #allocation7 [shape = 'u8[131072]{0}', space=vmem, size = 0x20000, scoped, tag = 'input window, operand 3, single buffered']
    #allocation8 [shape = 'u8[131072]{0}', space=vmem, size = 0x20000, scoped, tag = 'input window, operand 5, single buffered']
    #allocation9 [shape = 's32[1]{0}', space=sflag, size = 0x4, scoped, tag = 'scoped memory for tpu_custom_call.1']
    #allocation10 [shape = 'u8[65536]{0}', space=vmem, size = 0x10000, scoped, tag = 'input window, operand 7, single buffered']
    #allocation11 [shape = 'u8[8192]{0}', space=vmem, size = 0x2000, scoped, tag = 'output window, operand 0, single buffered']
    %14 = vsyncpa [#allocation3], 0
    %15 = vsyncpa [#allocation6], 0
    %16 = vsyncpa [#allocation9], 0
    %17 = vsyncpa [#allocation4], 0
    // Predicated region
    $region2: #{tpu_custom_call.1} parent=1 // pred_check
      _
    $region3: #{tpu_custom_call.1} parent=1 // pred_check_branch
      %19 = sbr.rel (0) target = $region5
    $region4: #{tpu_custom_call.1} parent=1 // pred_region
      %s21 = ssub.s32 896, 896
      %22 = vsyncadd [#allocation3], %s21
      %s23 = sshll.u32 [#allocation2], 4
      %s24 = int_to_ptr.vmem [resolvable:$true] %s23
      %29 = dma.hbm_to_vmem [thread:$0]  %s0, 896, %s24, [#allocation3], 448, 448, 28
    $region5: #{tpu_custom_call.1} parent=1 // pred_fallthru
      _
    // Predicated region
    $region6: #{tpu_custom_call.1} parent=1 // pred_check
      _
    $region7: #{tpu_custom_call.1} parent=1 // pred_check_branch
      %31 = sbr.rel (0) target = $region9
    $region8: #{tpu_custom_call.1} parent=1 // pred_region
      %s33 = ssub.s32 14336, 14336
      %34 = vsyncadd [#allocation6], %s33
      %s35 = sshll.u32 [#allocation5], 4
      %s36 = int_to_ptr.vmem [resolvable:$true] %s35
      %41 = dma.hbm_to_vmem [thread:$0]  %s1, 14336, %s36, [#allocation6], 128, 128, 8
    $region9: #{tpu_custom_call.1} parent=1 // pred_fallthru
      _
    // Predicated region
    $region10: #{tpu_custom_call.1} parent=1 // pred_check
      _
    $region11: #{tpu_custom_call.1} parent=1 // pred_check_branch
      %43 = sbr.rel (0) target = $region13
    $region12: #{tpu_custom_call.1} parent=1 // pred_region
      _
    $region13: #{tpu_custom_call.1} parent=1 // pred_fallthru
      _
    // Predicated region
    $region14: #{tpu_custom_call.1} parent=1 // pred_check
      _
    $region15: #{tpu_custom_call.1} parent=1 // pred_check_branch
      %45 = sbr.rel (0) target = $region17
    $region16: #{tpu_custom_call.1} parent=1 // pred_region
      %s47 = ssub.s32 4096, 4096
      %48 = vsyncadd [#allocation6], %s47
      %s49 = sshll.u32 [#allocation7], 4
      %s50 = int_to_ptr.vmem [resolvable:$true] %s49
      %55 = dma.hbm_to_vmem [thread:$0]  %s3, 4096, %s50, [#allocation6], 128, 128, 8
    $region17: #{tpu_custom_call.1} parent=1 // pred_fallthru
      _
    // Predicated region
    $region18: #{tpu_custom_call.1} parent=1 // pred_check
      _
    $region19: #{tpu_custom_call.1} parent=1 // pred_check_branch
      %57 = sbr.rel (0) target = $region21
    $region20: #{tpu_custom_call.1} parent=1 // pred_region
      _
    $region21: #{tpu_custom_call.1} parent=1 // pred_fallthru
      _
    // Predicated region
    $region22: #{tpu_custom_call.1} parent=1 // pred_check
      _
    $region23: #{tpu_custom_call.1} parent=1 // pred_check_branch
      %59 = sbr.rel (0) target = $region25
    $region24: #{tpu_custom_call.1} parent=1 // pred_region
      %s61 = ssub.s32 4096, 4096
      %62 = vsyncadd [#allocation9], %s61
      %s63 = sshll.u32 [#allocation8], 4
      %s64 = int_to_ptr.vmem [resolvable:$true] %s63
      %69 = dma.hbm_to_vmem [thread:$0]  %s5, 4096, %s64, [#allocation9], 128, 128, 8
    $region25: #{tpu_custom_call.1} parent=1 // pred_fallthru
      _
    // Predicated region
    $region26: #{tpu_custom_call.1} parent=1 // pred_check
      _
    $region27: #{tpu_custom_call.1} parent=1 // pred_check_branch
      %71 = sbr.rel (0) target = $region29
    $region28: #{tpu_custom_call.1} parent=1 // pred_region
      _
    $region29: #{tpu_custom_call.1} parent=1 // pred_fallthru
      _
    // Predicated region
    $region30: #{tpu_custom_call.1} parent=1 // pred_check
      _
    $region31: #{tpu_custom_call.1} parent=1 // pred_check_branch
      %73 = sbr.rel (0) target = $region33
    $region32: #{tpu_custom_call.1} parent=1 // pred_region
      %s75 = ssub.s32 2048, 2048
      %76 = vsyncadd [#allocation9], %s75
      %s77 = sshll.u32 [#allocation10], 4
      %s78 = int_to_ptr.vmem [resolvable:$true] %s77
      %83 = dma.hbm_to_vmem [thread:$0]  %s7, 2048, %s78, [#allocation9], 64, 64, 4
    $region33: #{tpu_custom_call.1} parent=1 // pred_fallthru
      _
    // Predicated region
    $region34: #{tpu_custom_call.1} parent=1 // pred_check
      _
    $region35: #{tpu_custom_call.1} parent=1 // pred_check_branch
      %85 = sbr.rel (0) target = $region37
    $region36: #{tpu_custom_call.1} parent=1 // pred_region
      _
    $region37: #{tpu_custom_call.1} parent=1 // pred_fallthru
      _
    // Predicated region
    $region38: #{tpu_custom_call.1} parent=1 // pred_check
      _
    $region39: #{tpu_custom_call.1} parent=1 // pred_check_branch
      %87 = sbr.rel (0) target = $region41
    $region40: #{tpu_custom_call.1} parent=1 // pred_region
      %88 = dma.done [#allocation3], 896
    $region41: #{tpu_custom_call.1} parent=1 // pred_fallthru
      _
    // Predicated region
    $region42: #{tpu_custom_call.1} parent=1 // pred_check
      _
    $region43: #{tpu_custom_call.1} parent=1 // pred_check_branch
      %90 = sbr.rel (0) target = $region45
    $region44: #{tpu_custom_call.1} parent=1 // pred_region
      %91 = dma.done [#allocation6], 14336
    $region45: #{tpu_custom_call.1} parent=1 // pred_fallthru
      _
    // Predicated region
    $region46: #{tpu_custom_call.1} parent=1 // pred_check
      _
    $region47: #{tpu_custom_call.1} parent=1 // pred_check_branch
      %93 = sbr.rel (0) target = $region49
    $region48: #{tpu_custom_call.1} parent=1 // pred_region
      %94 = dma.done [#allocation6], 4096
    $region49: #{tpu_custom_call.1} parent=1 // pred_fallthru
      _
    // Predicated region
    $region50: #{tpu_custom_call.1} parent=1 // pred_check
      _
    $region51: #{tpu_custom_call.1} parent=1 // pred_check_branch
      %96 = sbr.rel (0) target = $region53
    $region52: #{tpu_custom_call.1} parent=1 // pred_region
      %97 = dma.done [#allocation9], 4096
    $region53: #{tpu_custom_call.1} parent=1 // pred_fallthru
      _
    // Predicated region
    $region54: #{tpu_custom_call.1} parent=1 // pred_check
      _
    $region55: #{tpu_custom_call.1} parent=1 // pred_check_branch
      %99 = sbr.rel (0) target = $region57
    $region56: #{tpu_custom_call.1} parent=1 // pred_region
      %100 = dma.done [#allocation9], 2048
    $region57: #{tpu_custom_call.1} parent=1 // pred_fallthru
      _
    %v102 = vld [vmem:[#allocation2] sm:$0xff]
    %v103 = vld [vmem:[#allocation2 + $0x8] sm:$0xff]
    %v104 = vld [vmem:[#allocation2 + $0x10] sm:$0xff]
    %v105 = vld [vmem:[#allocation2 + $0x18] sm:$0xf]
    %v106 = vld [vmem:[#allocation2 + $0x1c] sm:$0xff]
    %v107 = vld [vmem:[#allocation2 + $0x24] sm:$0xff]
    %v108 = vld [vmem:[#allocation2 + $0x2c] sm:$0xff]
    %v109 = vld [vmem:[#allocation2 + $0x34] sm:$0xf]
    %v110 = vld [vmem:[#allocation5] sm:$0xff]
    %v111 = vld [vmem:[#allocation5 + $0x8] sm:$0xff]
    %v112 = vld [vmem:[#allocation5 + $0x10] sm:$0xff]
    %v113 = vld [vmem:[#allocation5 + $0x18] sm:$0xff]
    %v114 = vld [vmem:[#allocation5 + $0x20] sm:$0xff]
    %v115 = vld [vmem:[#allocation5 + $0x28] sm:$0xff]
    %v116 = vld [vmem:[#allocation5 + $0x30] sm:$0xff]
    %v117 = vld [vmem:[#allocation5 + $0x38] sm:$0xff]
    %v118 = vld [vmem:[#allocation5 + $0x40] sm:$0xff]
    %v119 = vld [vmem:[#allocation5 + $0x48] sm:$0xff]
    %v120 = vld [vmem:[#allocation5 + $0x50] sm:$0xff]
    %v121 = vld [vmem:[#allocation5 + $0x58] sm:$0xff]
    %v122 = vld [vmem:[#allocation5 + $0x60] sm:$0xff]
    %v123 = vld [vmem:[#allocation5 + $0x68] sm:$0xff]
    %v124 = vld [vmem:[#allocation5 + $0x70] sm:$0xff]
    %v125 = vld [vmem:[#allocation5 + $0x78] sm:$0xff]
    %v126 = vld [vmem:[#allocation5 + $0x80] sm:$0xff]
    %v127 = vld [vmem:[#allocation5 + $0x88] sm:$0xff]
    %v128 = vld [vmem:[#allocation5 + $0x90] sm:$0xff]
    %v129 = vld [vmem:[#allocation5 + $0x98] sm:$0xff]
    %v130 = vld [vmem:[#allocation5 + $0xa0] sm:$0xff]
    %v131 = vld [vmem:[#allocation5 + $0xa8] sm:$0xff]
    %v132 = vld [vmem:[#allocation5 + $0xb0] sm:$0xff]
    %v133 = vld [vmem:[#allocation5 + $0xb8] sm:$0xff]
    %v134 = vld [vmem:[#allocation5 + $0xc0] sm:$0xff]
    %v135 = vld [vmem:[#allocation5 + $0xc8] sm:$0xff]
    %v136 = vld [vmem:[#allocation5 + $0xd0] sm:$0xff]
    %v137 = vld [vmem:[#allocation5 + $0xd8] sm:$0xff]
    %v138 = vld [vmem:[#allocation5 + $0xe0] sm:$0xff]
    %v139 = vld [vmem:[#allocation5 + $0xe8] sm:$0xff]
    %v140 = vld [vmem:[#allocation5 + $0xf0] sm:$0xff]
    %v141 = vld [vmem:[#allocation5 + $0xf8] sm:$0xff]
    %v142 = vld [vmem:[#allocation5 + $0x100] sm:$0xff]
    %v143 = vld [vmem:[#allocation5 + $0x108] sm:$0xff]
    %v144 = vld [vmem:[#allocation5 + $0x110] sm:$0xff]
    %v145 = vld [vmem:[#allocation5 + $0x118] sm:$0xff]
    %v146 = vld [vmem:[#allocation5 + $0x120] sm:$0xff]
    %v147 = vld [vmem:[#allocation5 + $0x128] sm:$0xff]
    %v148 = vld [vmem:[#allocation5 + $0x130] sm:$0xff]
    %v149 = vld [vmem:[#allocation5 + $0x138] sm:$0xff]
    %v150 = vld [vmem:[#allocation5 + $0x140] sm:$0xff]
    %v151 = vld [vmem:[#allocation5 + $0x148] sm:$0xff]
    %v152 = vld [vmem:[#allocation5 + $0x150] sm:$0xff]
    %v153 = vld [vmem:[#allocation5 + $0x158] sm:$0xff]
    %v154 = vld [vmem:[#allocation5 + $0x160] sm:$0xff]
    %v155 = vld [vmem:[#allocation5 + $0x168] sm:$0xff]
    %v156 = vld [vmem:[#allocation5 + $0x170] sm:$0xff]
    %v157 = vld [vmem:[#allocation5 + $0x178] sm:$0xff]
    %v158 = vld [vmem:[#allocation5 + $0x180] sm:$0xff]
    %v159 = vld [vmem:[#allocation5 + $0x188] sm:$0xff]
    %v160 = vld [vmem:[#allocation5 + $0x190] sm:$0xff]
    %v161 = vld [vmem:[#allocation5 + $0x198] sm:$0xff]
    %v162 = vld [vmem:[#allocation5 + $0x1a0] sm:$0xff]
    %v163 = vld [vmem:[#allocation5 + $0x1a8] sm:$0xff]
    %v164 = vld [vmem:[#allocation5 + $0x1b0] sm:$0xff]
    %v165 = vld [vmem:[#allocation5 + $0x1b8] sm:$0xff]
    %v166 = vld [vmem:[#allocation5 + $0x1c0] sm:$0xff]
    %v167 = vld [vmem:[#allocation5 + $0x1c8] sm:$0xff]
    %v168 = vld [vmem:[#allocation5 + $0x1d0] sm:$0xff]
    %v169 = vld [vmem:[#allocation5 + $0x1d8] sm:$0xff]
    %v170 = vld [vmem:[#allocation5 + $0x1e0] sm:$0xff]
    %v171 = vld [vmem:[#allocation5 + $0x1e8] sm:$0xff]
    %v172 = vld [vmem:[#allocation5 + $0x1f0] sm:$0xff]
    %v173 = vld [vmem:[#allocation5 + $0x1f8] sm:$0xff]
    %v174 = vld [vmem:[#allocation5 + $0x200] sm:$0xff]
    %v175 = vld [vmem:[#allocation5 + $0x208] sm:$0xff]
    %v176 = vld [vmem:[#allocation5 + $0x210] sm:$0xff]
    %v177 = vld [vmem:[#allocation5 + $0x218] sm:$0xff]
    %v178 = vld [vmem:[#allocation5 + $0x220] sm:$0xff]
    %v179 = vld [vmem:[#allocation5 + $0x228] sm:$0xff]
    %v180 = vld [vmem:[#allocation5 + $0x230] sm:$0xff]
    %v181 = vld [vmem:[#allocation5 + $0x238] sm:$0xff]
    %v182 = vld [vmem:[#allocation5 + $0x240] sm:$0xff]
    %v183 = vld [vmem:[#allocation5 + $0x248] sm:$0xff]
    %v184 = vld [vmem:[#allocation5 + $0x250] sm:$0xff]
    %v185 = vld [vmem:[#allocation5 + $0x258] sm:$0xff]
    %v186 = vld [vmem:[#allocation5 + $0x260] sm:$0xff]
    %v187 = vld [vmem:[#allocation5 + $0x268] sm:$0xff]
    %v188 = vld [vmem:[#allocation5 + $0x270] sm:$0xff]
    %v189 = vld [vmem:[#allocation5 + $0x278] sm:$0xff]
    %v190 = vld [vmem:[#allocation5 + $0x280] sm:$0xff]
    %v191 = vld [vmem:[#allocation5 + $0x288] sm:$0xff]
    %v192 = vld [vmem:[#allocation5 + $0x290] sm:$0xff]
    %v193 = vld [vmem:[#allocation5 + $0x298] sm:$0xff]
    %v194 = vld [vmem:[#allocation5 + $0x2a0] sm:$0xff]
    %v195 = vld [vmem:[#allocation5 + $0x2a8] sm:$0xff]
    %v196 = vld [vmem:[#allocation5 + $0x2b0] sm:$0xff]
    %v197 = vld [vmem:[#allocation5 + $0x2b8] sm:$0xff]
    %v198 = vld [vmem:[#allocation5 + $0x2c0] sm:$0xff]
    %v199 = vld [vmem:[#allocation5 + $0x2c8] sm:$0xff]
    %v200 = vld [vmem:[#allocation5 + $0x2d0] sm:$0xff]
    %v201 = vld [vmem:[#allocation5 + $0x2d8] sm:$0xff]
    %v202 = vld [vmem:[#allocation5 + $0x2e0] sm:$0xff]
    %v203 = vld [vmem:[#allocation5 + $0x2e8] sm:$0xff]
    %v204 = vld [vmem:[#allocation5 + $0x2f0] sm:$0xff]
    %v205 = vld [vmem:[#allocation5 + $0x2f8] sm:$0xff]
    %v206 = vld [vmem:[#allocation5 + $0x300] sm:$0xff]
    %v207 = vld [vmem:[#allocation5 + $0x308] sm:$0xff]
    %v208 = vld [vmem:[#allocation5 + $0x310] sm:$0xff]
    %v209 = vld [vmem:[#allocation5 + $0x318] sm:$0xff]
    %v210 = vld [vmem:[#allocation5 + $0x320] sm:$0xff]
    %v211 = vld [vmem:[#allocation5 + $0x328] sm:$0xff]
    %v212 = vld [vmem:[#allocation5 + $0x330] sm:$0xff]
    %v213 = vld [vmem:[#allocation5 + $0x338] sm:$0xff]
    %v214 = vld [vmem:[#allocation5 + $0x340] sm:$0xff]
    %v215 = vld [vmem:[#allocation5 + $0x348] sm:$0xff]
    %v216 = vld [vmem:[#allocation5 + $0x350] sm:$0xff]
    %v217 = vld [vmem:[#allocation5 + $0x358] sm:$0xff]
    %v218 = vld [vmem:[#allocation5 + $0x360] sm:$0xff]
    %v219 = vld [vmem:[#allocation5 + $0x368] sm:$0xff]
    %v220 = vld [vmem:[#allocation5 + $0x370] sm:$0xff]
    %v221 = vld [vmem:[#allocation5 + $0x378] sm:$0xff]
    %v222 = vld [vmem:[%s2] sm:$0x3]
    %v224 = vlaneseq
    %v225 = vshrl.u32 %v224, 7
    %v226 = vsub.s32 0, %v225
    %v227 = vrot.slane %v222, %v226
    %v228 = vlaneseq
    %v229 = vshrl.u32 %v228, 7
    %v230 = vsub.s32 1, %v229
    %v231 = vrot.slane %v222, %v230
    %v242 = vunpack.c.l.b16 %v102
    %v243 = vunpack.c.h.b16 %v102
    %v244 = vunpack.c.l.b16 %v103
    %v245 = vunpack.c.h.b16 %v103
    %v246 = vunpack.c.l.b16 %v104
    %v247 = vunpack.c.h.b16 %v104
    %v248 = vunpack.c.l.b16 %v105
    %v249 = vunpack.c.l.b16 %v106
    %v250 = vunpack.c.h.b16 %v106
    %v251 = vunpack.c.l.b16 %v107
    %v252 = vunpack.c.h.b16 %v107
    %v253 = vunpack.c.l.b16 %v108
    %v254 = vunpack.c.h.b16 %v108
    %v255 = vunpack.c.l.b16 %v109
    %v256 = vpack.c.b16 %v249, %v242
    %v257 = vpack.c.b16 %v250, %v243
    %v258 = vpack.c.b16 %v251, %v244
    %v259 = vpack.c.b16 %v252, %v245
    %v260 = vpack.c.b16 %v253, %v246
    %v261 = vpack.c.b16 %v254, %v247
    %v262 = vpack.c.b16 %v255, %v248
    %v382 = vunpack.c.l.b16 %v110
    %v383 = vunpack.c.h.b16 %v110
    %v384 = vunpack.c.l.b16 %v111
    %v385 = vunpack.c.h.b16 %v111
    %v386 = vunpack.c.l.b16 %v112
    %v387 = vunpack.c.h.b16 %v112
    %v388 = vunpack.c.l.b16 %v113
    %v389 = vunpack.c.h.b16 %v113
    %v390 = vunpack.c.l.b16 %v114
    %v391 = vunpack.c.h.b16 %v114
    %v392 = vunpack.c.l.b16 %v115
    %v393 = vunpack.c.h.b16 %v115
    %v394 = vunpack.c.l.b16 %v116
    %v395 = vunpack.c.h.b16 %v116
    %v396 = vunpack.c.l.b16 %v117
    %v397 = vunpack.c.h.b16 %v117
    %v398 = vunpack.c.l.b16 %v118
    %v399 = vunpack.c.h.b16 %v118
    %v400 = vunpack.c.l.b16 %v119
    %v401 = vunpack.c.h.b16 %v119
    %v402 = vunpack.c.l.b16 %v120
    %v403 = vunpack.c.h.b16 %v120
    %v404 = vunpack.c.l.b16 %v121
    %v405 = vunpack.c.h.b16 %v121
    %v406 = vunpack.c.l.b16 %v122
    %v407 = vunpack.c.h.b16 %v122
    %v408 = vunpack.c.l.b16 %v123
    %v409 = vunpack.c.h.b16 %v123
    %v410 = vunpack.c.l.b16 %v124
    %v411 = vunpack.c.h.b16 %v124
    %v412 = vunpack.c.l.b16 %v125
    %v413 = vunpack.c.h.b16 %v125
    %v414 = vunpack.c.l.b16 %v126
    %v415 = vunpack.c.h.b16 %v126
    %v416 = vunpack.c.l.b16 %v127
    %v417 = vunpack.c.h.b16 %v127
    %v418 = vunpack.c.l.b16 %v128
    %v419 = vunpack.c.h.b16 %v128
    %v420 = vunpack.c.l.b16 %v129
    %v421 = vunpack.c.h.b16 %v129
    %v422 = vunpack.c.l.b16 %v130
    %v423 = vunpack.c.h.b16 %v130
    %v424 = vunpack.c.l.b16 %v131
    %v425 = vunpack.c.h.b16 %v131
    %v426 = vunpack.c.l.b16 %v132
    %v427 = vunpack.c.h.b16 %v132
    %v428 = vunpack.c.l.b16 %v133
    %v429 = vunpack.c.h.b16 %v133
    %v430 = vunpack.c.l.b16 %v134
    %v431 = vunpack.c.h.b16 %v134
    %v432 = vunpack.c.l.b16 %v135
    %v433 = vunpack.c.h.b16 %v135
    %v434 = vunpack.c.l.b16 %v136
    %v435 = vunpack.c.h.b16 %v136
    %v436 = vunpack.c.l.b16 %v137
    %v437 = vunpack.c.h.b16 %v137
    %v438 = vunpack.c.l.b16 %v138
    %v439 = vunpack.c.h.b16 %v138
    %v440 = vunpack.c.l.b16 %v139
    %v441 = vunpack.c.h.b16 %v139
    %v442 = vunpack.c.l.b16 %v140
    %v443 = vunpack.c.h.b16 %v140
    %v444 = vunpack.c.l.b16 %v141
    %v445 = vunpack.c.h.b16 %v141
    %v446 = vunpack.c.l.b16 %v142
    %v447 = vunpack.c.h.b16 %v142
    %v448 = vunpack.c.l.b16 %v143
    %v449 = vunpack.c.h.b16 %v143
    %v450 = vunpack.c.l.b16 %v144
    %v451 = vunpack.c.h.b16 %v144
    %v452 = vunpack.c.l.b16 %v145
    %v453 = vunpack.c.h.b16 %v145
    %v454 = vunpack.c.l.b16 %v146
    %v455 = vunpack.c.h.b16 %v146
    %v456 = vunpack.c.l.b16 %v147
    %v457 = vunpack.c.h.b16 %v147
    %v458 = vunpack.c.l.b16 %v148
    %v459 = vunpack.c.h.b16 %v148
    %v460 = vunpack.c.l.b16 %v149
    %v461 = vunpack.c.h.b16 %v149
    %v462 = vunpack.c.l.b16 %v150
    %v463 = vunpack.c.h.b16 %v150
    %v464 = vunpack.c.l.b16 %v151
    %v465 = vunpack.c.h.b16 %v151
    %v466 = vunpack.c.l.b16 %v152
    %v467 = vunpack.c.h.b16 %v152
    %v468 = vunpack.c.l.b16 %v153
    %v469 = vunpack.c.h.b16 %v153
    %v470 = vunpack.c.l.b16 %v154
    %v471 = vunpack.c.h.b16 %v154
    %v472 = vunpack.c.l.b16 %v155
    %v473 = vunpack.c.h.b16 %v155
    %v474 = vunpack.c.l.b16 %v156
    %v475 = vunpack.c.h.b16 %v156
    %v476 = vunpack.c.l.b16 %v157
    %v477 = vunpack.c.h.b16 %v157
    %v478 = vunpack.c.l.b16 %v158
    %v479 = vunpack.c.h.b16 %v158
    %v480 = vunpack.c.l.b16 %v159
    %v481 = vunpack.c.h.b16 %v159
    %v482 = vunpack.c.l.b16 %v160
    %v483 = vunpack.c.h.b16 %v160
    %v484 = vunpack.c.l.b16 %v161
    %v485 = vunpack.c.h.b16 %v161
    %v486 = vunpack.c.l.b16 %v162
    %v487 = vunpack.c.h.b16 %v162
    %v488 = vunpack.c.l.b16 %v163
    %v489 = vunpack.c.h.b16 %v163
    %v490 = vunpack.c.l.b16 %v164
    %v491 = vunpack.c.h.b16 %v164
    %v492 = vunpack.c.l.b16 %v165
    %v493 = vunpack.c.h.b16 %v165
    %v494 = vunpack.c.l.b16 %v166
    %v495 = vunpack.c.h.b16 %v166
    %v496 = vunpack.c.l.b16 %v167
    %v497 = vunpack.c.h.b16 %v167
    %v498 = vunpack.c.l.b16 %v168
    %v499 = vunpack.c.h.b16 %v168
    %v500 = vunpack.c.l.b16 %v169
    %v501 = vunpack.c.h.b16 %v169
    %v502 = vunpack.c.l.b16 %v170
    %v503 = vunpack.c.h.b16 %v170
    %v504 = vunpack.c.l.b16 %v171
    %v505 = vunpack.c.h.b16 %v171
    %v506 = vunpack.c.l.b16 %v172
    %v507 = vunpack.c.h.b16 %v172
    %v508 = vunpack.c.l.b16 %v173
    %v509 = vunpack.c.h.b16 %v173
    %v510 = vunpack.c.l.b16 %v174
    %v511 = vunpack.c.h.b16 %v174
    %v512 = vunpack.c.l.b16 %v175
    %v513 = vunpack.c.h.b16 %v175
    %v514 = vunpack.c.l.b16 %v176
    %v515 = vunpack.c.h.b16 %v176
    %v516 = vunpack.c.l.b16 %v177
    %v517 = vunpack.c.h.b16 %v177
    %v518 = vunpack.c.l.b16 %v178
    %v519 = vunpack.c.h.b16 %v178
    %v520 = vunpack.c.l.b16 %v179
    %v521 = vunpack.c.h.b16 %v179
    %v522 = vunpack.c.l.b16 %v180
    %v523 = vunpack.c.h.b16 %v180
    %v524 = vunpack.c.l.b16 %v181
    %v525 = vunpack.c.h.b16 %v181
    %v526 = vunpack.c.l.b16 %v182
    %v527 = vunpack.c.h.b16 %v182
    %v528 = vunpack.c.l.b16 %v183
    %v529 = vunpack.c.h.b16 %v183
    %v530 = vunpack.c.l.b16 %v184
    %v531 = vunpack.c.h.b16 %v184
    %v532 = vunpack.c.l.b16 %v185
    %v533 = vunpack.c.h.b16 %v185
    %v534 = vunpack.c.l.b16 %v186
    %v535 = vunpack.c.h.b16 %v186
    %v536 = vunpack.c.l.b16 %v187
    %v537 = vunpack.c.h.b16 %v187
    %v538 = vunpack.c.l.b16 %v188
    %v539 = vunpack.c.h.b16 %v188
    %v540 = vunpack.c.l.b16 %v189
    %v541 = vunpack.c.h.b16 %v189
    %v542 = vunpack.c.l.b16 %v190
    %v543 = vunpack.c.h.b16 %v190
    %v544 = vunpack.c.l.b16 %v191
    %v545 = vunpack.c.h.b16 %v191
    %v546 = vunpack.c.l.b16 %v192
    %v547 = vunpack.c.h.b16 %v192
    %v548 = vunpack.c.l.b16 %v193
    %v549 = vunpack.c.h.b16 %v193
    %v550 = vunpack.c.l.b16 %v194
    %v551 = vunpack.c.h.b16 %v194
    %v552 = vunpack.c.l.b16 %v195
    %v553 = vunpack.c.h.b16 %v195
    %v554 = vunpack.c.l.b16 %v196
    %v555 = vunpack.c.h.b16 %v196
    %v556 = vunpack.c.l.b16 %v197
    %v557 = vunpack.c.h.b16 %v197
    %v558 = vunpack.c.l.b16 %v198
    %v559 = vunpack.c.h.b16 %v198
    %v560 = vunpack.c.l.b16 %v199
    %v561 = vunpack.c.h.b16 %v199
    %v562 = vunpack.c.l.b16 %v200
    %v563 = vunpack.c.h.b16 %v200
    %v564 = vunpack.c.l.b16 %v201
    %v565 = vunpack.c.h.b16 %v201
    %v566 = vunpack.c.l.b16 %v202
    %v567 = vunpack.c.h.b16 %v202
    %v568 = vunpack.c.l.b16 %v203
    %v569 = vunpack.c.h.b16 %v203
    %v570 = vunpack.c.l.b16 %v204
    %v571 = vunpack.c.h.b16 %v204
    %v572 = vunpack.c.l.b16 %v205
    %v573 = vunpack.c.h.b16 %v205
    %v574 = vunpack.c.l.b16 %v206
    %v575 = vunpack.c.h.b16 %v206
    %v576 = vunpack.c.l.b16 %v207
    %v577 = vunpack.c.h.b16 %v207
    %v578 = vunpack.c.l.b16 %v208
    %v579 = vunpack.c.h.b16 %v208
    %v580 = vunpack.c.l.b16 %v209
    %v581 = vunpack.c.h.b16 %v209
    %v582 = vunpack.c.l.b16 %v210
    %v583 = vunpack.c.h.b16 %v210
    %v584 = vunpack.c.l.b16 %v211
    %v585 = vunpack.c.h.b16 %v211
    %v586 = vunpack.c.l.b16 %v212
    %v587 = vunpack.c.h.b16 %v212
    %v588 = vunpack.c.l.b16 %v213
    %v589 = vunpack.c.h.b16 %v213
    %v590 = vunpack.c.l.b16 %v214
    %v591 = vunpack.c.h.b16 %v214
    %v592 = vunpack.c.l.b16 %v215
    %v593 = vunpack.c.h.b16 %v215
    %v594 = vunpack.c.l.b16 %v216
    %v595 = vunpack.c.h.b16 %v216
    %v596 = vunpack.c.l.b16 %v217
    %v597 = vunpack.c.h.b16 %v217
    %v598 = vunpack.c.l.b16 %v218
    %v599 = vunpack.c.h.b16 %v218
    %v600 = vunpack.c.l.b16 %v219
    %v601 = vunpack.c.h.b16 %v219
    %v602 = vunpack.c.l.b16 %v220
    %v603 = vunpack.c.h.b16 %v220
    %v604 = vunpack.c.l.b16 %v221
    %v605 = vunpack.c.h.b16 %v221
    %v606 = vpack.c.b16 %v384, %v382
    %v607 = vpack.c.b16 %v385, %v383
    %v608 = vpack.c.b16 %v388, %v386
    %v609 = vpack.c.b16 %v389, %v387
    %v610 = vpack.c.b16 %v392, %v390
    %v611 = vpack.c.b16 %v393, %v391
    %v612 = vpack.c.b16 %v396, %v394
    %v613 = vpack.c.b16 %v397, %v395
    %v614 = vpack.c.b16 %v400, %v398
    %v615 = vpack.c.b16 %v401, %v399
    %v616 = vpack.c.b16 %v404, %v402
    %v617 = vpack.c.b16 %v405, %v403
    %v618 = vpack.c.b16 %v408, %v406
    %v619 = vpack.c.b16 %v409, %v407
    %v620 = vpack.c.b16 %v412, %v410
    %v621 = vpack.c.b16 %v413, %v411
    %v622 = vpack.c.b16 %v416, %v414
    %v623 = vpack.c.b16 %v417, %v415
    %v624 = vpack.c.b16 %v420, %v418
    %v625 = vpack.c.b16 %v421, %v419
    %v626 = vpack.c.b16 %v424, %v422
    %v627 = vpack.c.b16 %v425, %v423
    %v628 = vpack.c.b16 %v428, %v426
    %v629 = vpack.c.b16 %v429, %v427
    %v630 = vpack.c.b16 %v432, %v430
    %v631 = vpack.c.b16 %v433, %v431
    %v632 = vpack.c.b16 %v436, %v434
    %v633 = vpack.c.b16 %v437, %v435
    %v634 = vpack.c.b16 %v440, %v438
    %v635 = vpack.c.b16 %v441, %v439
    %v636 = vpack.c.b16 %v444, %v442
    %v637 = vpack.c.b16 %v445, %v443
    %v638 = vpack.c.b16 %v448, %v446
    %v639 = vpack.c.b16 %v449, %v447
    %v640 = vpack.c.b16 %v452, %v450
    %v641 = vpack.c.b16 %v453, %v451
    %v642 = vpack.c.b16 %v456, %v454
    %v643 = vpack.c.b16 %v457, %v455
    %v644 = vpack.c.b16 %v460, %v458
    %v645 = vpack.c.b16 %v461, %v459
    %v646 = vpack.c.b16 %v464, %v462
    %v647 = vpack.c.b16 %v465, %v463
    %v648 = vpack.c.b16 %v468, %v466
    %v649 = vpack.c.b16 %v469, %v467
    %v650 = vpack.c.b16 %v472, %v470
    %v651 = vpack.c.b16 %v473, %v471
    %v652 = vpack.c.b16 %v476, %v474
    %v653 = vpack.c.b16 %v477, %v475
    %v654 = vpack.c.b16 %v480, %v478
    %v655 = vpack.c.b16 %v481, %v479
    %v656 = vpack.c.b16 %v484, %v482
    %v657 = vpack.c.b16 %v485, %v483
    %v658 = vpack.c.b16 %v488, %v486
    %v659 = vpack.c.b16 %v489, %v487
    %v660 = vpack.c.b16 %v492, %v490
    %v661 = vpack.c.b16 %v493, %v491
    %v662 = vpack.c.b16 %v496, %v494
    %v663 = vpack.c.b16 %v497, %v495
    %v664 = vpack.c.b16 %v500, %v498
    %v665 = vpack.c.b16 %v501, %v499
    %v666 = vpack.c.b16 %v504, %v502
    %v667 = vpack.c.b16 %v505, %v503
    %v668 = vpack.c.b16 %v508, %v506
    %v669 = vpack.c.b16 %v509, %v507
    %v670 = vpack.c.b16 %v512, %v510
    %v671 = vpack.c.b16 %v513, %v511
    %v672 = vpack.c.b16 %v516, %v514
    %v673 = vpack.c.b16 %v517, %v515
    %v674 = vpack.c.b16 %v520, %v518
    %v675 = vpack.c.b16 %v521, %v519
    %v676 = vpack.c.b16 %v524, %v522
    %v677 = vpack.c.b16 %v525, %v523
    %v678 = vpack.c.b16 %v528, %v526
    %v679 = vpack.c.b16 %v529, %v527
    %v680 = vpack.c.b16 %v532, %v530
    %v681 = vpack.c.b16 %v533, %v531
    %v682 = vpack.c.b16 %v536, %v534
    %v683 = vpack.c.b16 %v537, %v535
    %v684 = vpack.c.b16 %v540, %v538
    %v685 = vpack.c.b16 %v541, %v539
    %v686 = vpack.c.b16 %v544, %v542
    %v687 = vpack.c.b16 %v545, %v543
    %v688 = vpack.c.b16 %v548, %v546
    %v689 = vpack.c.b16 %v549, %v547
    %v690 = vpack.c.b16 %v552, %v550
    %v691 = vpack.c.b16 %v553, %v551
    %v692 = vpack.c.b16 %v556, %v554
    %v693 = vpack.c.b16 %v557, %v555
    %v694 = vpack.c.b16 %v560, %v558
    %v695 = vpack.c.b16 %v561, %v559
    %v696 = vpack.c.b16 %v564, %v562
    %v697 = vpack.c.b16 %v565, %v563
    %v698 = vpack.c.b16 %v568, %v566
    %v699 = vpack.c.b16 %v569, %v567
    %v700 = vpack.c.b16 %v572, %v570
    %v701 = vpack.c.b16 %v573, %v571
    %v702 = vpack.c.b16 %v576, %v574
    %v703 = vpack.c.b16 %v577, %v575
    %v704 = vpack.c.b16 %v580, %v578
    %v705 = vpack.c.b16 %v581, %v579
    %v706 = vpack.c.b16 %v584, %v582
    %v707 = vpack.c.b16 %v585, %v583
    %v708 = vpack.c.b16 %v588, %v586
    %v709 = vpack.c.b16 %v589, %v587
    %v710 = vpack.c.b16 %v592, %v590
    %v711 = vpack.c.b16 %v593, %v591
    %v712 = vpack.c.b16 %v596, %v594
    %v713 = vpack.c.b16 %v597, %v595
    %v714 = vpack.c.b16 %v600, %v598
    %v715 = vpack.c.b16 %v601, %v599
    %v716 = vpack.c.b16 %v604, %v602
    %v717 = vpack.c.b16 %v605, %v603
    %830 = vmatprep.subr.bf16.mxu0 %v621
    %831 = vmatpush1.bf16.msra.mxu0 %v620
    %832 = vmatprep.subr.bf16.mxu0 %v619
    %833 = vmatpush1.bf16.msra.mxu0 %v618
    %834 = vmatprep.subr.bf16.mxu0 %v617
    %835 = vmatpush1.bf16.msra.mxu0 %v616
    %836 = vmatprep.subr.bf16.mxu0 %v615
    %837 = vmatpush1.bf16.msra.mxu0 %v614
    %838 = vmatprep.subr.bf16.mxu0 %v613
    %839 = vmatpush1.bf16.msra.mxu0 %v612
    %840 = vmatprep.subr.bf16.mxu0 %v611
    %841 = vmatpush1.bf16.msra.mxu0 %v610
    %842 = vmatprep.subr.bf16.mxu0 %v609
    %843 = vmatpush1.bf16.msra.mxu0 %v608
    %844 = vmatprep.subr.bf16.mxu0 %v607
    %845 = vmatpush1.bf16.msra.mxu0 %v606
    %846 = vmatprep.subr.bf16.mxu0 %v637
    %847 = vmatpush2.bf16.msra.mxu0 %v636
    %848 = vmatprep.subr.bf16.mxu0 %v635
    %849 = vmatpush2.bf16.msra.mxu0 %v634
    %850 = vmatprep.subr.bf16.mxu0 %v633
    %851 = vmatpush2.bf16.msra.mxu0 %v632
    %852 = vmatprep.subr.bf16.mxu0 %v631
    %853 = vmatpush2.bf16.msra.mxu0 %v630
    %854 = vmatprep.subr.bf16.mxu0 %v629
    %855 = vmatpush2.bf16.msra.mxu0 %v628
    %856 = vmatprep.subr.bf16.mxu0 %v627
    %857 = vmatpush2.bf16.msra.mxu0 %v626
    %858 = vmatprep.subr.bf16.mxu0 %v625
    %859 = vmatpush2.bf16.msra.mxu0 %v624
    %860 = vmatprep.subr.bf16.mxu0 %v623
    %861 = vmatpush2.bf16.msra.mxu0 %v622
    %862 = vmatprep.mubr.bf16.mxu0 %v257
    %863 = vmatmul.mubr.bf16.gmra.mxu0 %v256
    %v864 = vpop.f32.mrf.mxu0
    %v865 = vadd.f32 %v227, %v864
    %v866 = vpop.f32.mrf.mxu0
    %v867 = vadd.f32 %v231, %v866
    %v868 = vpop.f32.mrf.mxu0
    %v869 = vadd.f32 %v227, %v868
    %v870 = vpop.f32.mrf.mxu0
    %v871 = vadd.f32 %v231, %v870
    %872 = vdwg.mxu0
    %873 = vmatprep.subr.bf16.mxu0 %v653
    %874 = vmatpush1.bf16.msra.mxu0 %v652
    %875 = vmatprep.subr.bf16.mxu0 %v651
    %876 = vmatpush1.bf16.msra.mxu0 %v650
    %877 = vmatprep.subr.bf16.mxu0 %v649
    %878 = vmatpush1.bf16.msra.mxu0 %v648
    %879 = vmatprep.subr.bf16.mxu0 %v647
    %880 = vmatpush1.bf16.msra.mxu0 %v646
    %881 = vmatprep.subr.bf16.mxu0 %v645
    %882 = vmatpush1.bf16.msra.mxu0 %v644
    %883 = vmatprep.subr.bf16.mxu0 %v643
    %884 = vmatpush1.bf16.msra.mxu0 %v642
    %885 = vmatprep.subr.bf16.mxu0 %v641
    %886 = vmatpush1.bf16.msra.mxu0 %v640
    %887 = vmatprep.subr.bf16.mxu0 %v639
    %888 = vmatpush1.bf16.msra.mxu0 %v638
    %889 = vmatprep.subr.bf16.mxu0 %v669
    %890 = vmatpush2.bf16.msra.mxu0 %v668
    %891 = vmatprep.subr.bf16.mxu0 %v667
    %892 = vmatpush2.bf16.msra.mxu0 %v666
    %893 = vmatprep.subr.bf16.mxu0 %v665
    %894 = vmatpush2.bf16.msra.mxu0 %v664
    %895 = vmatprep.subr.bf16.mxu0 %v663
    %896 = vmatpush2.bf16.msra.mxu0 %v662
    %897 = vmatprep.subr.bf16.mxu0 %v661
    %898 = vmatpush2.bf16.msra.mxu0 %v660
    %899 = vmatprep.subr.bf16.mxu0 %v659
    %900 = vmatpush2.bf16.msra.mxu0 %v658
    %901 = vmatprep.subr.bf16.mxu0 %v657
    %902 = vmatpush2.bf16.msra.mxu0 %v656
    %903 = vmatprep.subr.bf16.mxu0 %v655
    %904 = vmatpush2.bf16.msra.mxu0 %v654
    %905 = vmatprep.mubr.bf16.mxu0 %v259
    %906 = vmatmul.mubr.bf16.gmra.mxu0 %v258
    %v907 = vpop.f32.mrf.mxu0
    %v908 = vadd.f32 %v865, %v907
    %v909 = vpop.f32.mrf.mxu0
    %v910 = vadd.f32 %v867, %v909
    %v911 = vpop.f32.mrf.mxu0
    %v912 = vadd.f32 %v869, %v911
    %v913 = vpop.f32.mrf.mxu0
    %v914 = vadd.f32 %v871, %v913
    %915 = vdwg.mxu0
    %916 = vmatprep.subr.bf16.mxu0 %v685
    %917 = vmatpush1.bf16.msra.mxu0 %v684
    %918 = vmatprep.subr.bf16.mxu0 %v683
    %919 = vmatpush1.bf16.msra.mxu0 %v682
    %920 = vmatprep.subr.bf16.mxu0 %v681
    %921 = vmatpush1.bf16.msra.mxu0 %v680
    %922 = vmatprep.subr.bf16.mxu0 %v679
    %923 = vmatpush1.bf16.msra.mxu0 %v678
    %924 = vmatprep.subr.bf16.mxu0 %v677
    %925 = vmatpush1.bf16.msra.mxu0 %v676
    %926 = vmatprep.subr.bf16.mxu0 %v675
    %927 = vmatpush1.bf16.msra.mxu0 %v674
    %928 = vmatprep.subr.bf16.mxu0 %v673
    %929 = vmatpush1.bf16.msra.mxu0 %v672
    %930 = vmatprep.subr.bf16.mxu0 %v671
    %931 = vmatpush1.bf16.msra.mxu0 %v670
    %932 = vmatprep.subr.bf16.mxu0 %v701
    %933 = vmatpush2.bf16.msra.mxu0 %v700
    %934 = vmatprep.subr.bf16.mxu0 %v699
    %935 = vmatpush2.bf16.msra.mxu0 %v698
    %936 = vmatprep.subr.bf16.mxu0 %v697
    %937 = vmatpush2.bf16.msra.mxu0 %v696
    %938 = vmatprep.subr.bf16.mxu0 %v695
    %939 = vmatpush2.bf16.msra.mxu0 %v694
    %940 = vmatprep.subr.bf16.mxu0 %v693
    %941 = vmatpush2.bf16.msra.mxu0 %v692
    %942 = vmatprep.subr.bf16.mxu0 %v691
    %943 = vmatpush2.bf16.msra.mxu0 %v690
    %944 = vmatprep.subr.bf16.mxu0 %v689
    %945 = vmatpush2.bf16.msra.mxu0 %v688
    %946 = vmatprep.subr.bf16.mxu0 %v687
    %947 = vmatpush2.bf16.msra.mxu0 %v686
    %948 = vmatprep.mubr.bf16.mxu0 %v261
    %949 = vmatmul.mubr.bf16.gmra.mxu0 %v260
    %v950 = vpop.f32.mrf.mxu0
    %v951 = vadd.f32 %v908, %v950
    %v952 = vpop.f32.mrf.mxu0
    %v953 = vadd.f32 %v910, %v952
    %v954 = vpop.f32.mrf.mxu0
    %v955 = vadd.f32 %v912, %v954
    %v956 = vpop.f32.mrf.mxu0
    %v957 = vadd.f32 %v914, %v956
    %958 = vdwg.mxu0
    %959 = vmatprep.subr.bf16.mxu0 %v717
    %960 = vmatpush1.bf16.msra.mxu0 %v716
    %961 = vmatprep.subr.bf16.mxu0 %v715
    %962 = vmatpush1.bf16.msra.mxu0 %v714
    %963 = vmatprep.subr.bf16.mxu0 %v713
    %964 = vmatpush1.bf16.msra.mxu0 %v712
    %965 = vmatprep.subr.bf16.mxu0 %v711
    %966 = vmatpush1.bf16.msra.mxu0 %v710
    %967 = vmatprep.subr.bf16.mxu0 %v709
    %968 = vmatpush1.bf16.msra.mxu0 %v708
    %969 = vmatprep.subr.bf16.mxu0 %v707
    %970 = vmatpush1.bf16.msra.mxu0 %v706
    %971 = vmatprep.subr.bf16.mxu0 %v705
    %972 = vmatpush1.bf16.msra.mxu0 %v704
    %973 = vmatprep.subr.bf16.mxu0 %v703
    %974 = vmatpush1.bf16.msra.mxu0 %v702
    %975 = vmatprep.subr.bf16.mxu0 0
    %976 = vmatpush2.bf16.msra.mxu0 0
    %977 = vmatprep.subr.bf16.mxu0 0
    %978 = vmatpush2.bf16.msra.mxu0 0
    %979 = vmatprep.subr.bf16.mxu0 0
    %980 = vmatpush2.bf16.msra.mxu0 0
    %981 = vmatprep.subr.bf16.mxu0 0
    %982 = vmatpush2.bf16.msra.mxu0 0
    %983 = vmatprep.subr.bf16.mxu0 0
    %984 = vmatpush2.bf16.msra.mxu0 0
    %985 = vmatprep.subr.bf16.mxu0 0
    %986 = vmatpush2.bf16.msra.mxu0 0
    %987 = vmatprep.subr.bf16.mxu0 0
    %988 = vmatpush2.bf16.msra.mxu0 0
    %989 = vmatprep.subr.bf16.mxu0 0
    %990 = vmatpush2.bf16.msra.mxu0 0
    %991 = vmatprep.mubr.bf16.mxu0 0
    %992 = vmatmul.mubr.bf16.gmra.mxu0 %v262
    %v993 = vpop.f32.mrf.mxu0
    %v994 = vadd.f32 %v951, %v993
    %v995 = vpop.f32.mrf.mxu0
    %v996 = vadd.f32 %v953, %v995
    %v997 = vpop.f32.mrf.mxu0
    %v998 = vadd.f32 %v955, %v997
    %v999 = vpop.f32.mrf.mxu0
    %v1000 = vadd.f32 %v957, %v999
    %1001 = vdwg.mxu0
    %v1002 = vmax.f32 %v994, -0.5
    %v1003 = vmax.f32 %v996, -0.5
    %v1004 = vmax.f32 %v998, -0.5
    %v1005 = vmax.f32 %v1000, -0.5
    %v1006 = vmin.f32 %v1002, 0.5
    %v1007 = vmin.f32 %v1003, 0.5
    %v1008 = vmin.f32 %v1004, 0.5
    %v1009 = vmin.f32 %v1005, 0.5
    %v1010 = vsub.f32 %v994, %v1006
    %v1011 = vsub.f32 %v996, %v1007
    %v1012 = vsub.f32 %v998, %v1008
    %v1013 = vsub.f32 %v1000, %v1009
    %v1014 = vpack.c.bf16 %v1012, %v1010
    %v1015 = vpack.c.bf16 %v1013, %v1011
    %v1016 = vld [vmem:[#allocation7] sm:$0xff]
    %v1017 = vld [vmem:[#allocation7 + $0x8] sm:$0xff]
    %v1018 = vld [vmem:[#allocation7 + $0x10] sm:$0xff]
    %v1019 = vld [vmem:[#allocation7 + $0x18] sm:$0xff]
    %v1020 = vld [vmem:[#allocation7 + $0x20] sm:$0xff]
    %v1021 = vld [vmem:[#allocation7 + $0x28] sm:$0xff]
    %v1022 = vld [vmem:[#allocation7 + $0x30] sm:$0xff]
    %v1023 = vld [vmem:[#allocation7 + $0x38] sm:$0xff]
    %v1024 = vld [vmem:[#allocation7 + $0x40] sm:$0xff]
    %v1025 = vld [vmem:[#allocation7 + $0x48] sm:$0xff]
    %v1026 = vld [vmem:[#allocation7 + $0x50] sm:$0xff]
    %v1027 = vld [vmem:[#allocation7 + $0x58] sm:$0xff]
    %v1028 = vld [vmem:[#allocation7 + $0x60] sm:$0xff]
    %v1029 = vld [vmem:[#allocation7 + $0x68] sm:$0xff]
    %v1030 = vld [vmem:[#allocation7 + $0x70] sm:$0xff]
    %v1031 = vld [vmem:[#allocation7 + $0x78] sm:$0xff]
    %v1032 = vld [vmem:[#allocation7 + $0x80] sm:$0xff]
    %v1033 = vld [vmem:[#allocation7 + $0x88] sm:$0xff]
    %v1034 = vld [vmem:[#allocation7 + $0x90] sm:$0xff]
    %v1035 = vld [vmem:[#allocation7 + $0x98] sm:$0xff]
    %v1036 = vld [vmem:[#allocation7 + $0xa0] sm:$0xff]
    %v1037 = vld [vmem:[#allocation7 + $0xa8] sm:$0xff]
    %v1038 = vld [vmem:[#allocation7 + $0xb0] sm:$0xff]
    %v1039 = vld [vmem:[#allocation7 + $0xb8] sm:$0xff]
    %v1040 = vld [vmem:[#allocation7 + $0xc0] sm:$0xff]
    %v1041 = vld [vmem:[#allocation7 + $0xc8] sm:$0xff]
    %v1042 = vld [vmem:[#allocation7 + $0xd0] sm:$0xff]
    %v1043 = vld [vmem:[#allocation7 + $0xd8] sm:$0xff]
    %v1044 = vld [vmem:[#allocation7 + $0xe0] sm:$0xff]
    %v1045 = vld [vmem:[#allocation7 + $0xe8] sm:$0xff]
    %v1046 = vld [vmem:[#allocation7 + $0xf0] sm:$0xff]
    %v1047 = vld [vmem:[#allocation7 + $0xf8] sm:$0xff]
    %v1048 = vld [vmem:[%s4] sm:$0x3]
    %v1050 = vlaneseq
    %v1051 = vshrl.u32 %v1050, 7
    %v1052 = vsub.s32 0, %v1051
    %v1053 = vrot.slane %v1048, %v1052
    %v1054 = vlaneseq
    %v1055 = vshrl.u32 %v1054, 7
    %v1056 = vsub.s32 1, %v1055
    %v1057 = vrot.slane %v1048, %v1056
    %v1092 = vunpack.c.l.b16 %v1016
    %v1093 = vunpack.c.h.b16 %v1016
    %v1094 = vunpack.c.l.b16 %v1017
    %v1095 = vunpack.c.h.b16 %v1017
    %v1096 = vunpack.c.l.b16 %v1018
    %v1097 = vunpack.c.h.b16 %v1018
    %v1098 = vunpack.c.l.b16 %v1019
    %v1099 = vunpack.c.h.b16 %v1019
    %v1100 = vunpack.c.l.b16 %v1020
    %v1101 = vunpack.c.h.b16 %v1020
    %v1102 = vunpack.c.l.b16 %v1021
    %v1103 = vunpack.c.h.b16 %v1021
    %v1104 = vunpack.c.l.b16 %v1022
    %v1105 = vunpack.c.h.b16 %v1022
    %v1106 = vunpack.c.l.b16 %v1023
    %v1107 = vunpack.c.h.b16 %v1023
    %v1108 = vunpack.c.l.b16 %v1024
    %v1109 = vunpack.c.h.b16 %v1024
    %v1110 = vunpack.c.l.b16 %v1025
    %v1111 = vunpack.c.h.b16 %v1025
    %v1112 = vunpack.c.l.b16 %v1026
    %v1113 = vunpack.c.h.b16 %v1026
    %v1114 = vunpack.c.l.b16 %v1027
    %v1115 = vunpack.c.h.b16 %v1027
    %v1116 = vunpack.c.l.b16 %v1028
    %v1117 = vunpack.c.h.b16 %v1028
    %v1118 = vunpack.c.l.b16 %v1029
    %v1119 = vunpack.c.h.b16 %v1029
    %v1120 = vunpack.c.l.b16 %v1030
    %v1121 = vunpack.c.h.b16 %v1030
    %v1122 = vunpack.c.l.b16 %v1031
    %v1123 = vunpack.c.h.b16 %v1031
    %v1124 = vunpack.c.l.b16 %v1032
    %v1125 = vunpack.c.h.b16 %v1032
    %v1126 = vunpack.c.l.b16 %v1033
    %v1127 = vunpack.c.h.b16 %v1033
    %v1128 = vunpack.c.l.b16 %v1034
    %v1129 = vunpack.c.h.b16 %v1034
    %v1130 = vunpack.c.l.b16 %v1035
    %v1131 = vunpack.c.h.b16 %v1035
    %v1132 = vunpack.c.l.b16 %v1036
    %v1133 = vunpack.c.h.b16 %v1036
    %v1134 = vunpack.c.l.b16 %v1037
    %v1135 = vunpack.c.h.b16 %v1037
    %v1136 = vunpack.c.l.b16 %v1038
    %v1137 = vunpack.c.h.b16 %v1038
    %v1138 = vunpack.c.l.b16 %v1039
    %v1139 = vunpack.c.h.b16 %v1039
    %v1140 = vunpack.c.l.b16 %v1040
    %v1141 = vunpack.c.h.b16 %v1040
    %v1142 = vunpack.c.l.b16 %v1041
    %v1143 = vunpack.c.h.b16 %v1041
    %v1144 = vunpack.c.l.b16 %v1042
    %v1145 = vunpack.c.h.b16 %v1042
    %v1146 = vunpack.c.l.b16 %v1043
    %v1147 = vunpack.c.h.b16 %v1043
    %v1148 = vunpack.c.l.b16 %v1044
    %v1149 = vunpack.c.h.b16 %v1044
    %v1150 = vunpack.c.l.b16 %v1045
    %v1151 = vunpack.c.h.b16 %v1045
    %v1152 = vunpack.c.l.b16 %v1046
    %v1153 = vunpack.c.h.b16 %v1046
    %v1154 = vunpack.c.l.b16 %v1047
    %v1155 = vunpack.c.h.b16 %v1047
    %v1156 = vpack.c.b16 %v1094, %v1092
    %v1157 = vpack.c.b16 %v1095, %v1093
    %v1158 = vpack.c.b16 %v1098, %v1096
    %v1159 = vpack.c.b16 %v1099, %v1097
    %v1160 = vpack.c.b16 %v1102, %v1100
    %v1161 = vpack.c.b16 %v1103, %v1101
    %v1162 = vpack.c.b16 %v1106, %v1104
    %v1163 = vpack.c.b16 %v1107, %v1105
    %v1164 = vpack.c.b16 %v1110, %v1108
    %v1165 = vpack.c.b16 %v1111, %v1109
    %v1166 = vpack.c.b16 %v1114, %v1112
    %v1167 = vpack.c.b16 %v1115, %v1113
    %v1168 = vpack.c.b16 %v1118, %v1116
    %v1169 = vpack.c.b16 %v1119, %v1117
    %v1170 = vpack.c.b16 %v1122, %v1120
    %v1171 = vpack.c.b16 %v1123, %v1121
    %v1172 = vpack.c.b16 %v1126, %v1124
    %v1173 = vpack.c.b16 %v1127, %v1125
    %v1174 = vpack.c.b16 %v1130, %v1128
    %v1175 = vpack.c.b16 %v1131, %v1129
    %v1176 = vpack.c.b16 %v1134, %v1132
    %v1177 = vpack.c.b16 %v1135, %v1133
    %v1178 = vpack.c.b16 %v1138, %v1136
    %v1179 = vpack.c.b16 %v1139, %v1137
    %v1180 = vpack.c.b16 %v1142, %v1140
    %v1181 = vpack.c.b16 %v1143, %v1141
    %v1182 = vpack.c.b16 %v1146, %v1144
    %v1183 = vpack.c.b16 %v1147, %v1145
    %v1184 = vpack.c.b16 %v1150, %v1148
    %v1185 = vpack.c.b16 %v1151, %v1149
    %v1186 = vpack.c.b16 %v1154, %v1152
    %v1187 = vpack.c.b16 %v1155, %v1153
    %1220 = vmatprep.subr.bf16.mxu0 %v1171
    %1221 = vmatpush1.bf16.msra.mxu0 %v1170
    %1222 = vmatprep.subr.bf16.mxu0 %v1169
    %1223 = vmatpush1.bf16.msra.mxu0 %v1168
    %1224 = vmatprep.subr.bf16.mxu0 %v1167
    %1225 = vmatpush1.bf16.msra.mxu0 %v1166
    %1226 = vmatprep.subr.bf16.mxu0 %v1165
    %1227 = vmatpush1.bf16.msra.mxu0 %v1164
    %1228 = vmatprep.subr.bf16.mxu0 %v1163
    %1229 = vmatpush1.bf16.msra.mxu0 %v1162
    %1230 = vmatprep.subr.bf16.mxu0 %v1161
    %1231 = vmatpush1.bf16.msra.mxu0 %v1160
    %1232 = vmatprep.subr.bf16.mxu0 %v1159
    %1233 = vmatpush1.bf16.msra.mxu0 %v1158
    %1234 = vmatprep.subr.bf16.mxu0 %v1157
    %1235 = vmatpush1.bf16.msra.mxu0 %v1156
    %1236 = vmatprep.subr.bf16.mxu0 %v1187
    %1237 = vmatpush2.bf16.msra.mxu0 %v1186
    %1238 = vmatprep.subr.bf16.mxu0 %v1185
    %1239 = vmatpush2.bf16.msra.mxu0 %v1184
    %1240 = vmatprep.subr.bf16.mxu0 %v1183
    %1241 = vmatpush2.bf16.msra.mxu0 %v1182
    %1242 = vmatprep.subr.bf16.mxu0 %v1181
    %1243 = vmatpush2.bf16.msra.mxu0 %v1180
    %1244 = vmatprep.subr.bf16.mxu0 %v1179
    %1245 = vmatpush2.bf16.msra.mxu0 %v1178
    %1246 = vmatprep.subr.bf16.mxu0 %v1177
    %1247 = vmatpush2.bf16.msra.mxu0 %v1176
    %1248 = vmatprep.subr.bf16.mxu0 %v1175
    %1249 = vmatpush2.bf16.msra.mxu0 %v1174
    %1250 = vmatprep.subr.bf16.mxu0 %v1173
    %1251 = vmatpush2.bf16.msra.mxu0 %v1172
    %1252 = vmatprep.mubr.bf16.mxu0 %v1015
    %1253 = vmatmul.mubr.bf16.gmra.mxu0 %v1014
    %v1254 = vpop.f32.mrf.mxu0
    %v1255 = vadd.f32 %v1053, %v1254
    %v1256 = vpop.f32.mrf.mxu0
    %v1257 = vadd.f32 %v1057, %v1256
    %v1258 = vpop.f32.mrf.mxu0
    %v1259 = vadd.f32 %v1053, %v1258
    %v1260 = vpop.f32.mrf.mxu0
    %v1261 = vadd.f32 %v1057, %v1260
    %1262 = vdwg.mxu0
    %v1263 = vmax.f32 %v1255, -0.5
    %v1264 = vmax.f32 %v1257, -0.5
    %v1265 = vmax.f32 %v1259, -0.5
    %v1266 = vmax.f32 %v1261, -0.5
    %v1267 = vmin.f32 %v1263, 0.5
    %v1268 = vmin.f32 %v1264, 0.5
    %v1269 = vmin.f32 %v1265, 0.5
    %v1270 = vmin.f32 %v1266, 0.5
    %v1271 = vsub.f32 %v1255, %v1267
    %v1272 = vsub.f32 %v1257, %v1268
    %v1273 = vsub.f32 %v1259, %v1269
    %v1274 = vsub.f32 %v1261, %v1270
    %v1275 = vpack.c.bf16 %v1273, %v1271
    %v1276 = vpack.c.bf16 %v1274, %v1272
    %v1277 = vld [vmem:[#allocation8] sm:$0xff]
    %v1278 = vld [vmem:[#allocation8 + $0x8] sm:$0xff]
    %v1279 = vld [vmem:[#allocation8 + $0x10] sm:$0xff]
    %v1280 = vld [vmem:[#allocation8 + $0x18] sm:$0xff]
    %v1281 = vld [vmem:[#allocation8 + $0x20] sm:$0xff]
    %v1282 = vld [vmem:[#allocation8 + $0x28] sm:$0xff]
    %v1283 = vld [vmem:[#allocation8 + $0x30] sm:$0xff]
    %v1284 = vld [vmem:[#allocation8 + $0x38] sm:$0xff]
    %v1285 = vld [vmem:[#allocation8 + $0x40] sm:$0xff]
    %v1286 = vld [vmem:[#allocation8 + $0x48] sm:$0xff]
    %v1287 = vld [vmem:[#allocation8 + $0x50] sm:$0xff]
    %v1288 = vld [vmem:[#allocation8 + $0x58] sm:$0xff]
    %v1289 = vld [vmem:[#allocation8 + $0x60] sm:$0xff]
    %v1290 = vld [vmem:[#allocation8 + $0x68] sm:$0xff]
    %v1291 = vld [vmem:[#allocation8 + $0x70] sm:$0xff]
    %v1292 = vld [vmem:[#allocation8 + $0x78] sm:$0xff]
    %v1293 = vld [vmem:[#allocation8 + $0x80] sm:$0xff]
    %v1294 = vld [vmem:[#allocation8 + $0x88] sm:$0xff]
    %v1295 = vld [vmem:[#allocation8 + $0x90] sm:$0xff]
    %v1296 = vld [vmem:[#allocation8 + $0x98] sm:$0xff]
    %v1297 = vld [vmem:[#allocation8 + $0xa0] sm:$0xff]
    %v1298 = vld [vmem:[#allocation8 + $0xa8] sm:$0xff]
    %v1299 = vld [vmem:[#allocation8 + $0xb0] sm:$0xff]
    %v1300 = vld [vmem:[#allocation8 + $0xb8] sm:$0xff]
    %v1301 = vld [vmem:[#allocation8 + $0xc0] sm:$0xff]
    %v1302 = vld [vmem:[#allocation8 + $0xc8] sm:$0xff]
    %v1303 = vld [vmem:[#allocation8 + $0xd0] sm:$0xff]
    %v1304 = vld [vmem:[#allocation8 + $0xd8] sm:$0xff]
    %v1305 = vld [vmem:[#allocation8 + $0xe0] sm:$0xff]
    %v1306 = vld [vmem:[#allocation8 + $0xe8] sm:$0xff]
    %v1307 = vld [vmem:[#allocation8 + $0xf0] sm:$0xff]
    %v1308 = vld [vmem:[#allocation8 + $0xf8] sm:$0xff]
    %v1309 = vld [vmem:[%s6] sm:$0x3]
    %v1311 = vlaneseq
    %v1312 = vshrl.u32 %v1311, 7
    %v1313 = vsub.s32 0, %v1312
    %v1314 = vrot.slane %v1309, %v1313
    %v1315 = vlaneseq
    %v1316 = vshrl.u32 %v1315, 7
    %v1317 = vsub.s32 1, %v1316
    %v1318 = vrot.slane %v1309, %v1317
    %v1353 = vunpack.c.l.b16 %v1277
    %v1354 = vunpack.c.h.b16 %v1277
    %v1355 = vunpack.c.l.b16 %v1278
    %v1356 = vunpack.c.h.b16 %v1278
    %v1357 = vunpack.c.l.b16 %v1279
    %v1358 = vunpack.c.h.b16 %v1279
    %v1359 = vunpack.c.l.b16 %v1280
    %v1360 = vunpack.c.h.b16 %v1280
    %v1361 = vunpack.c.l.b16 %v1281
    %v1362 = vunpack.c.h.b16 %v1281
    %v1363 = vunpack.c.l.b16 %v1282
    %v1364 = vunpack.c.h.b16 %v1282
    %v1365 = vunpack.c.l.b16 %v1283
    %v1366 = vunpack.c.h.b16 %v1283
    %v1367 = vunpack.c.l.b16 %v1284
    %v1368 = vunpack.c.h.b16 %v1284
    %v1369 = vunpack.c.l.b16 %v1285
    %v1370 = vunpack.c.h.b16 %v1285
    %v1371 = vunpack.c.l.b16 %v1286
    %v1372 = vunpack.c.h.b16 %v1286
    %v1373 = vunpack.c.l.b16 %v1287
    %v1374 = vunpack.c.h.b16 %v1287
    %v1375 = vunpack.c.l.b16 %v1288
    %v1376 = vunpack.c.h.b16 %v1288
    %v1377 = vunpack.c.l.b16 %v1289
    %v1378 = vunpack.c.h.b16 %v1289
    %v1379 = vunpack.c.l.b16 %v1290
    %v1380 = vunpack.c.h.b16 %v1290
    %v1381 = vunpack.c.l.b16 %v1291
    %v1382 = vunpack.c.h.b16 %v1291
    %v1383 = vunpack.c.l.b16 %v1292
    %v1384 = vunpack.c.h.b16 %v1292
    %v1385 = vunpack.c.l.b16 %v1293
    %v1386 = vunpack.c.h.b16 %v1293
    %v1387 = vunpack.c.l.b16 %v1294
    %v1388 = vunpack.c.h.b16 %v1294
    %v1389 = vunpack.c.l.b16 %v1295
    %v1390 = vunpack.c.h.b16 %v1295
    %v1391 = vunpack.c.l.b16 %v1296
    %v1392 = vunpack.c.h.b16 %v1296
    %v1393 = vunpack.c.l.b16 %v1297
    %v1394 = vunpack.c.h.b16 %v1297
    %v1395 = vunpack.c.l.b16 %v1298
    %v1396 = vunpack.c.h.b16 %v1298
    %v1397 = vunpack.c.l.b16 %v1299
    %v1398 = vunpack.c.h.b16 %v1299
    %v1399 = vunpack.c.l.b16 %v1300
    %v1400 = vunpack.c.h.b16 %v1300
    %v1401 = vunpack.c.l.b16 %v1301
    %v1402 = vunpack.c.h.b16 %v1301
    %v1403 = vunpack.c.l.b16 %v1302
    %v1404 = vunpack.c.h.b16 %v1302
    %v1405 = vunpack.c.l.b16 %v1303
    %v1406 = vunpack.c.h.b16 %v1303
    %v1407 = vunpack.c.l.b16 %v1304
    %v1408 = vunpack.c.h.b16 %v1304
    %v1409 = vunpack.c.l.b16 %v1305
    %v1410 = vunpack.c.h.b16 %v1305
    %v1411 = vunpack.c.l.b16 %v1306
    %v1412 = vunpack.c.h.b16 %v1306
    %v1413 = vunpack.c.l.b16 %v1307
    %v1414 = vunpack.c.h.b16 %v1307
    %v1415 = vunpack.c.l.b16 %v1308
    %v1416 = vunpack.c.h.b16 %v1308
    %v1417 = vpack.c.b16 %v1355, %v1353
    %v1418 = vpack.c.b16 %v1356, %v1354
    %v1419 = vpack.c.b16 %v1359, %v1357
    %v1420 = vpack.c.b16 %v1360, %v1358
    %v1421 = vpack.c.b16 %v1363, %v1361
    %v1422 = vpack.c.b16 %v1364, %v1362
    %v1423 = vpack.c.b16 %v1367, %v1365
    %v1424 = vpack.c.b16 %v1368, %v1366
    %v1425 = vpack.c.b16 %v1371, %v1369
    %v1426 = vpack.c.b16 %v1372, %v1370
    %v1427 = vpack.c.b16 %v1375, %v1373
    %v1428 = vpack.c.b16 %v1376, %v1374
    %v1429 = vpack.c.b16 %v1379, %v1377
    %v1430 = vpack.c.b16 %v1380, %v1378
    %v1431 = vpack.c.b16 %v1383, %v1381
    %v1432 = vpack.c.b16 %v1384, %v1382
    %v1433 = vpack.c.b16 %v1387, %v1385
    %v1434 = vpack.c.b16 %v1388, %v1386
    %v1435 = vpack.c.b16 %v1391, %v1389
    %v1436 = vpack.c.b16 %v1392, %v1390
    %v1437 = vpack.c.b16 %v1395, %v1393
    %v1438 = vpack.c.b16 %v1396, %v1394
    %v1439 = vpack.c.b16 %v1399, %v1397
    %v1440 = vpack.c.b16 %v1400, %v1398
    %v1441 = vpack.c.b16 %v1403, %v1401
    %v1442 = vpack.c.b16 %v1404, %v1402
    %v1443 = vpack.c.b16 %v1407, %v1405
    %v1444 = vpack.c.b16 %v1408, %v1406
    %v1445 = vpack.c.b16 %v1411, %v1409
    %v1446 = vpack.c.b16 %v1412, %v1410
    %v1447 = vpack.c.b16 %v1415, %v1413
    %v1448 = vpack.c.b16 %v1416, %v1414
    %1481 = vmatprep.subr.bf16.mxu0 %v1432
    %1482 = vmatpush1.bf16.msra.mxu0 %v1431
    %1483 = vmatprep.subr.bf16.mxu0 %v1430
    %1484 = vmatpush1.bf16.msra.mxu0 %v1429
    %1485 = vmatprep.subr.bf16.mxu0 %v1428
    %1486 = vmatpush1.bf16.msra.mxu0 %v1427
    %1487 = vmatprep.subr.bf16.mxu0 %v1426
    %1488 = vmatpush1.bf16.msra.mxu0 %v1425
    %1489 = vmatprep.subr.bf16.mxu0 %v1424
    %1490 = vmatpush1.bf16.msra.mxu0 %v1423
    %1491 = vmatprep.subr.bf16.mxu0 %v1422
    %1492 = vmatpush1.bf16.msra.mxu0 %v1421
    %1493 = vmatprep.subr.bf16.mxu0 %v1420
    %1494 = vmatpush1.bf16.msra.mxu0 %v1419
    %1495 = vmatprep.subr.bf16.mxu0 %v1418
    %1496 = vmatpush1.bf16.msra.mxu0 %v1417
    %1497 = vmatprep.subr.bf16.mxu0 %v1448
    %1498 = vmatpush2.bf16.msra.mxu0 %v1447
    %1499 = vmatprep.subr.bf16.mxu0 %v1446
    %1500 = vmatpush2.bf16.msra.mxu0 %v1445
    %1501 = vmatprep.subr.bf16.mxu0 %v1444
    %1502 = vmatpush2.bf16.msra.mxu0 %v1443
    %1503 = vmatprep.subr.bf16.mxu0 %v1442
    %1504 = vmatpush2.bf16.msra.mxu0 %v1441
    %1505 = vmatprep.subr.bf16.mxu0 %v1440
    %1506 = vmatpush2.bf16.msra.mxu0 %v1439
    %1507 = vmatprep.subr.bf16.mxu0 %v1438
    %1508 = vmatpush2.bf16.msra.mxu0 %v1437
    %1509 = vmatprep.subr.bf16.mxu0 %v1436
    %1510 = vmatpush2.bf16.msra.mxu0 %v1435
    %1511 = vmatprep.subr.bf16.mxu0 %v1434
    %1512 = vmatpush2.bf16.msra.mxu0 %v1433
    %1513 = vmatprep.mubr.bf16.mxu0 %v1276
    %1514 = vmatmul.mubr.bf16.gmra.mxu0 %v1275
    %v1515 = vpop.f32.mrf.mxu0
    %v1516 = vadd.f32 %v1314, %v1515
    %v1517 = vpop.f32.mrf.mxu0
    %v1518 = vadd.f32 %v1318, %v1517
    %v1519 = vpop.f32.mrf.mxu0
    %v1520 = vadd.f32 %v1314, %v1519
    %v1521 = vpop.f32.mrf.mxu0
    %v1522 = vadd.f32 %v1318, %v1521
    %1523 = vdwg.mxu0
    %v1524 = vmax.f32 %v1516, -0.5
    %v1525 = vmax.f32 %v1518, -0.5
    %v1526 = vmax.f32 %v1520, -0.5
    %v1527 = vmax.f32 %v1522, -0.5
    %v1528 = vmin.f32 %v1524, 0.5
    %v1529 = vmin.f32 %v1525, 0.5
    %v1530 = vmin.f32 %v1526, 0.5
    %v1531 = vmin.f32 %v1527, 0.5
    %v1532 = vsub.f32 %v1516, %v1528
    %v1533 = vsub.f32 %v1518, %v1529
    %v1534 = vsub.f32 %v1520, %v1530
    %v1535 = vsub.f32 %v1522, %v1531
    %v1536 = vpack.c.bf16 %v1534, %v1532
    %v1537 = vpack.c.bf16 %v1535, %v1533
    %v1538 = vld [vmem:[#allocation10] sm:$0xf]
    %v1539 = vld [vmem:[#allocation10 + $0x4] sm:$0xf]
    %v1540 = vld [vmem:[#allocation10 + $0x8] sm:$0xf]
    %v1541 = vld [vmem:[#allocation10 + $0xc] sm:$0xf]
    %v1542 = vld [vmem:[#allocation10 + $0x10] sm:$0xf]
    %v1543 = vld [vmem:[#allocation10 + $0x14] sm:$0xf]
    %v1544 = vld [vmem:[#allocation10 + $0x18] sm:$0xf]
    %v1545 = vld [vmem:[#allocation10 + $0x1c] sm:$0xf]
    %v1546 = vld [vmem:[#allocation10 + $0x20] sm:$0xf]
    %v1547 = vld [vmem:[#allocation10 + $0x24] sm:$0xf]
    %v1548 = vld [vmem:[#allocation10 + $0x28] sm:$0xf]
    %v1549 = vld [vmem:[#allocation10 + $0x2c] sm:$0xf]
    %v1550 = vld [vmem:[#allocation10 + $0x30] sm:$0xf]
    %v1551 = vld [vmem:[#allocation10 + $0x34] sm:$0xf]
    %v1552 = vld [vmem:[#allocation10 + $0x38] sm:$0xf]
    %v1553 = vld [vmem:[#allocation10 + $0x3c] sm:$0xf]
    %v1554 = vld [vmem:[#allocation10 + $0x40] sm:$0xf]
    %v1555 = vld [vmem:[#allocation10 + $0x44] sm:$0xf]
    %v1556 = vld [vmem:[#allocation10 + $0x48] sm:$0xf]
    %v1557 = vld [vmem:[#allocation10 + $0x4c] sm:$0xf]
    %v1558 = vld [vmem:[#allocation10 + $0x50] sm:$0xf]
    %v1559 = vld [vmem:[#allocation10 + $0x54] sm:$0xf]
    %v1560 = vld [vmem:[#allocation10 + $0x58] sm:$0xf]
    %v1561 = vld [vmem:[#allocation10 + $0x5c] sm:$0xf]
    %v1562 = vld [vmem:[#allocation10 + $0x60] sm:$0xf]
    %v1563 = vld [vmem:[#allocation10 + $0x64] sm:$0xf]
    %v1564 = vld [vmem:[#allocation10 + $0x68] sm:$0xf]
    %v1565 = vld [vmem:[#allocation10 + $0x6c] sm:$0xf]
    %v1566 = vld [vmem:[#allocation10 + $0x70] sm:$0xf]
    %v1567 = vld [vmem:[#allocation10 + $0x74] sm:$0xf]
    %v1568 = vld [vmem:[#allocation10 + $0x78] sm:$0xf]
    %v1569 = vld [vmem:[#allocation10 + $0x7c] sm:$0xf]
    %v1570 = vld [vmem:[%s8] sm:$0x1]
    %v1572 = vlaneseq
    %v1573 = vshrl.u32 %v1572, 7
    %v1574 = vsub.s32 0, %v1573
    %v1575 = vrot.slane %v1570, %v1574
    %v1609 = vunpack.c.l.b16 %v1538
    %v1610 = vunpack.c.l.b16 %v1539
    %v1611 = vunpack.c.l.b16 %v1540
    %v1612 = vunpack.c.l.b16 %v1541
    %v1613 = vunpack.c.l.b16 %v1542
    %v1614 = vunpack.c.l.b16 %v1543
    %v1615 = vunpack.c.l.b16 %v1544
    %v1616 = vunpack.c.l.b16 %v1545
    %v1617 = vunpack.c.l.b16 %v1546
    %v1618 = vunpack.c.l.b16 %v1547
    %v1619 = vunpack.c.l.b16 %v1548
    %v1620 = vunpack.c.l.b16 %v1549
    %v1621 = vunpack.c.l.b16 %v1550
    %v1622 = vunpack.c.l.b16 %v1551
    %v1623 = vunpack.c.l.b16 %v1552
    %v1624 = vunpack.c.l.b16 %v1553
    %v1625 = vunpack.c.l.b16 %v1554
    %v1626 = vunpack.c.l.b16 %v1555
    %v1627 = vunpack.c.l.b16 %v1556
    %v1628 = vunpack.c.l.b16 %v1557
    %v1629 = vunpack.c.l.b16 %v1558
    %v1630 = vunpack.c.l.b16 %v1559
    %v1631 = vunpack.c.l.b16 %v1560
    %v1632 = vunpack.c.l.b16 %v1561
    %v1633 = vunpack.c.l.b16 %v1562
    %v1634 = vunpack.c.l.b16 %v1563
    %v1635 = vunpack.c.l.b16 %v1564
    %v1636 = vunpack.c.l.b16 %v1565
    %v1637 = vunpack.c.l.b16 %v1566
    %v1638 = vunpack.c.l.b16 %v1567
    %v1639 = vunpack.c.l.b16 %v1568
    %v1640 = vunpack.c.l.b16 %v1569
    %v1641 = vpack.c.b16 %v1610, %v1609
    %v1642 = vpack.c.b16 %v1612, %v1611
    %v1643 = vpack.c.b16 %v1614, %v1613
    %v1644 = vpack.c.b16 %v1616, %v1615
    %v1645 = vpack.c.b16 %v1618, %v1617
    %v1646 = vpack.c.b16 %v1620, %v1619
    %v1647 = vpack.c.b16 %v1622, %v1621
    %v1648 = vpack.c.b16 %v1624, %v1623
    %v1649 = vpack.c.b16 %v1626, %v1625
    %v1650 = vpack.c.b16 %v1628, %v1627
    %v1651 = vpack.c.b16 %v1630, %v1629
    %v1652 = vpack.c.b16 %v1632, %v1631
    %v1653 = vpack.c.b16 %v1634, %v1633
    %v1654 = vpack.c.b16 %v1636, %v1635
    %v1655 = vpack.c.b16 %v1638, %v1637
    %v1656 = vpack.c.b16 %v1640, %v1639
    %1673 = vmatprep.subr.bf16.mxu0 0
    %1674 = vmatpush1.bf16.msra.mxu0 %v1648
    %1675 = vmatprep.subr.bf16.mxu0 0
    %1676 = vmatpush1.bf16.msra.mxu0 %v1647
    %1677 = vmatprep.subr.bf16.mxu0 0
    %1678 = vmatpush1.bf16.msra.mxu0 %v1646
    %1679 = vmatprep.subr.bf16.mxu0 0
    %1680 = vmatpush1.bf16.msra.mxu0 %v1645
    %1681 = vmatprep.subr.bf16.mxu0 0
    %1682 = vmatpush1.bf16.msra.mxu0 %v1644
    %1683 = vmatprep.subr.bf16.mxu0 0
    %1684 = vmatpush1.bf16.msra.mxu0 %v1643
    %1685 = vmatprep.subr.bf16.mxu0 0
    %1686 = vmatpush1.bf16.msra.mxu0 %v1642
    %1687 = vmatprep.subr.bf16.mxu0 0
    %1688 = vmatpush1.bf16.msra.mxu0 %v1641
    %1689 = vmatprep.subr.bf16.mxu0 0
    %1690 = vmatpush2.bf16.msra.mxu0 %v1656
    %1691 = vmatprep.subr.bf16.mxu0 0
    %1692 = vmatpush2.bf16.msra.mxu0 %v1655
    %1693 = vmatprep.subr.bf16.mxu0 0
    %1694 = vmatpush2.bf16.msra.mxu0 %v1654
    %1695 = vmatprep.subr.bf16.mxu0 0
    %1696 = vmatpush2.bf16.msra.mxu0 %v1653
    %1697 = vmatprep.subr.bf16.mxu0 0
    %1698 = vmatpush2.bf16.msra.mxu0 %v1652
    %1699 = vmatprep.subr.bf16.mxu0 0
    %1700 = vmatpush2.bf16.msra.mxu0 %v1651
    %1701 = vmatprep.subr.bf16.mxu0 0
    %1702 = vmatpush2.bf16.msra.mxu0 %v1650
    %1703 = vmatprep.subr.bf16.mxu0 0
    %1704 = vmatpush2.bf16.msra.mxu0 %v1649
    %1705 = vmatprep.mubr.bf16.mxu0 %v1537
    %1706 = vmatmul.mubr.bf16.gmra.mxu0 %v1536
    %v1707 = vpop.f32.mrf.mxu0
    %v1708 = vadd.f32 %v1575, %v1707
    %v1709 = vpop.f32.mrf.mxu0
    %v1710 = vpop.f32.mrf.mxu0
    %v1711 = vadd.f32 %v1575, %v1710
    %v1712 = vpop.f32.mrf.mxu0
    %1713 = vdwg.mxu0
    %1714 = vst [vmem:[#allocation11] sm:$0xff] %v1708
    %1715 = vst [vmem:[#allocation11 + $0x8] sm:$0xff] %v1711
    // Predicated region
    $region58: #{tpu_custom_call.1} parent=1 // pred_check
      _
    $region59: #{tpu_custom_call.1} parent=1 // pred_check_branch
      %1717 = sbr.rel (0) target = $region61
    $region60: #{tpu_custom_call.1} parent=1 // pred_region
      %s1719 = ssub.s32 256, 256
      %1720 = vsyncadd [#allocation4], %s1719
      %s1721 = sshll.u32 [#allocation11], 4
      %s1722 = int_to_ptr.vmem [resolvable:$true] %s1721
      %1727 = dma.vmem_to_hbm [thread:$0]  %s1722, 256, %s9, [#allocation4], 128, 128, 8
    $region61: #{tpu_custom_call.1} parent=1 // pred_fallthru
      _
    // Predicated region
    $region62: #{tpu_custom_call.1} parent=1 // pred_check
      _
    $region63: #{tpu_custom_call.1} parent=1 // pred_check_branch
      %1729 = sbr.rel (0) target = $region65
    $region64: #{tpu_custom_call.1} parent=1 // pred_region
      %1730 = dma.done [#allocation4], 256
    $region65: #{tpu_custom_call.1} parent=1 // pred_fallthru
      _
    %1731 = vsyncpa [#allocation3], 1
    %1732 = vsyncpa [#allocation6], 1
    %1733 = vsyncpa [#allocation9], 1
    %1734 = vsyncpa [#allocation4], 1

</llo_original>
